<compile_context>
chip_gen: v5e
topology: v5e:2x2
jax: 0.10.0
libtpu: 0.0.40
codegen_flags: <defaults>
</compile_context>

<pallas_src>
import jax
import jax.numpy as jnp
from jax.experimental import pallas as pl
from jax.experimental.pallas import tpu as pltpu

NUM_LAYERS = 3    # number of InvertibleLayer instances in the ModuleList
NUM_CHUNKS = 2    # independent sub-chains per batch tile (hides MXU drain/cast gaps)


def iae_kernel(x_ref, w_ref, b_ref, winv_ref, o_ref):
    """Whole autoencoder forward (encode then decode) for one batch tile.

    x_ref:    (TB, D)     input activations (VMEM), bf16
    w_ref:    (L, D, D)   per-layer forward weights, bf16
    b_ref:    (L, 1, D)   per-layer biases, f32
    winv_ref: (L, D, D)   per-layer inverse weights (W^-1), bf16
    o_ref:    (TB, D)     reconstructed output, f32
    """
    tb = x_ref.shape[0]
    # Split the tile into independent row sub-chunks so the two 6-dot chains
    # interleave on the MXU. Only chunk when the split is sublane-aligned.
    nch = NUM_CHUNKS if (tb % NUM_CHUNKS == 0 and (tb // NUM_CHUNKS) % 8 == 0) else 1
    cs = tb // nch

    hs = [x_ref[pl.ds(c * cs, cs), :] for c in range(nch)]     # bf16 chunks

    # ---- encode: apply layers in order ----
    for i in range(NUM_LAYERS):
        hs = [jnp.dot(h.astype(jnp.bfloat16), w_ref[i],
                      preferred_element_type=jnp.float32) for h in hs]
        if i < NUM_LAYERS - 1:
            # last-layer "+b" cancels exactly with decode's first "-b" (folded)
            hs = [h + b_ref[i] for h in hs]                     # f32 bias math (v5e VPU)

    # ---- decode: apply layer inverses in reverse order ----
    for i in reversed(range(NUM_LAYERS)):
        if i < NUM_LAYERS - 1:
            hs = [h - b_ref[i] for h in hs]
        hs = [jnp.dot(h.astype(jnp.bfloat16), winv_ref[i],
                      preferred_element_type=jnp.float32) for h in hs]

    for c in range(nch):
        o_ref[pl.ds(c * cs, cs), :] = hs[c].astype(o_ref.dtype)


def _pick_tb(B):
    """Default batch-tile size.

    B <= 256: one grid step (minimal per-step overhead; best on 1-TC v5e/v6e,
    and tiny either way). Larger B: an even number of parallel steps so v7x's
    two TensorCores both get work, tiles capped at 512 rows.
    """
    if B <= 256:
        return B
    n_tiles = max(2, pl.cdiv(B, 512))
    if n_tiles % 2:
        n_tiles += 1
    tb = pl.cdiv(B, n_tiles)
    return ((tb + 7) // 8) * 8          # sublane-align


def invertible_autoencoder(x, w, b, winv, *, tb=None):
    """x: (B, D) f32 or bf16; w/winv: (L, D, D) bf16; b: (L, 1, D) f32."""
    B, D = x.shape
    L = w.shape[0]
    if tb is None:
        tb = _pick_tb(B)
    tb = min(tb, B)
    grid = (pl.cdiv(B, tb),)

    # Cast x to bf16 in the wrapper: the first MXU dot would cast it anyway,
    # so numerics are identical and the x DMA bytes are halved.
    x_bf = x.astype(jnp.bfloat16)

    # advisory scheduling hint for XLA
    flops = 2 * (2 * L) * B * D * D + 2 * (L - 1) * B * D
    bytes_accessed = (B * D * 2                          # x in (bf16)
                      + B * D * 4                        # out (f32)
                      + 2 * L * D * D * 2                # w + winv (bf16)
                      + L * D * 4)                       # biases (f32)
    cost = pl.CostEstimate(flops=flops, transcendentals=0,
                           bytes_accessed=bytes_accessed)

    # Weight residency: w/b/winv never change block index, so double-buffering
    # them is pure VMEM waste. In the large-D regime, single-buffer them and
    # raise the scoped-VMEM limit explicitly (capped at 64 MiB = v7x ceiling).
    weight_bytes = 2 * L * D * D * w.dtype.itemsize + L * D * b.dtype.itemsize
    const_spec_kwargs = {}
    compiler_kwargs = dict(dimension_semantics=("parallel",))
    if weight_bytes > (4 << 20):
        const_spec_kwargs = dict(pipeline_mode=pl.Buffered(1))
        act_bytes = 2 * 2 * tb * D * (2 + 4)             # double-buffered x(bf16)+out(f32)
        compiler_kwargs["vmem_limit_bytes"] = min(
            64 << 20, int(1.5 * (weight_bytes + act_bytes)))

    return pl.pallas_call(
        iae_kernel,
        out_shape=jax.ShapeDtypeStruct((B, D), jnp.float32),
        grid=grid,
        in_specs=[
            pl.BlockSpec((tb, D), lambda i: (i, 0)),                       # x: batch-tiled
            pl.BlockSpec((L, D, D), lambda i: (0, 0, 0), **const_spec_kwargs),  # w
            pl.BlockSpec((L, 1, D), lambda i: (0, 0, 0), **const_spec_kwargs),  # b
            pl.BlockSpec((L, D, D), lambda i: (0, 0, 0), **const_spec_kwargs),  # winv
        ],
        out_specs=pl.BlockSpec((tb, D), lambda i: (i, 0)),
        compiler_params=pltpu.CompilerParams(**compiler_kwargs),
        cost_estimate=cost,
    )(x_bf, w, b, winv)


def ref_forward(x, w, b, winv):
    """Pure-JAX reference with identical numerics (bf16 MXU operands, f32 acc,
    same +b/-b fold on the last layer)."""
    h = x.astype(jnp.bfloat16)
    for i in range(NUM_LAYERS):
        h = jnp.dot(h.astype(jnp.bfloat16), w[i],
                    preferred_element_type=jnp.float32)
        if i < NUM_LAYERS - 1:
            h = h + b[i][0]
    for i in reversed(range(NUM_LAYERS)):
        if i < NUM_LAYERS - 1:
            h = h - b[i][0]
        h = jnp.dot(h.astype(jnp.bfloat16), winv[i],
                    preferred_element_type=jnp.float32)
    return h


if __name__ == "__main__":
    B, D = 256, 128   # batch, feature width (feature axis aligned to 128 lanes)

    key = jax.random.PRNGKey(0)
    kx, kw, kb = jax.random.split(key, 3)

    x = jax.random.normal(kx, (B, D), dtype=jnp.float32)

    # Deterministic invertible weights: orthogonalize random matrices (QR).
    # Store forward weights in bf16 (MXU operand dtype) and invert the
    # bf16-rounded weight so decode undoes exactly what encode applied.
    raw = jax.random.normal(kw, (NUM_LAYERS, D, D), dtype=jnp.float32)
    w_f32 = jnp.stack([jnp.linalg.qr(raw[i])[0] for i in range(NUM_LAYERS)], axis=0)
    w = w_f32.astype(jnp.bfloat16)
    winv = jnp.stack(
        [jnp.linalg.inv(w[i].astype(jnp.float32)) for i in range(NUM_LAYERS)],
        axis=0,
    ).astype(jnp.bfloat16)
    b = 0.1 * jax.random.normal(kb, (NUM_LAYERS, 1, D), dtype=jnp.float32)

    out = invertible_autoencoder(x, w, b, winv)   # auto-tile: B=256 -> single grid step
    out = jax.block_until_ready(out)

    ref = ref_forward(x, w, b, winv)
    assert jnp.allclose(out, ref, atol=2e-3, rtol=2e-3), "mismatch vs JAX reference"

    # invertibility sanity check: decode(encode(x)) ~ x
    # (tolerance at bf16 weight/activation rounding level — expected, not a bug)
    assert jnp.allclose(out, x, atol=1e-1, rtol=1e-1), "autoencoder not invertible"

    print("KERNEL_OK")
</pallas_src>

<mosaic_0001>
module attributes {stable_mosaic.version = 11 : i64} {
  func.func @iae_kernel(%arg0: i32, %arg1: memref<256x128xbf16, #tpu.memory_space<vmem>>, %arg2: memref<3x128x128xbf16, #tpu.memory_space<vmem>>, %arg3: memref<3x1x128xf32, #tpu.memory_space<vmem>>, %arg4: memref<3x128x128xbf16, #tpu.memory_space<vmem>>, %arg5: memref<256x128xf32, #tpu.memory_space<vmem>>) attributes {dimension_semantics = [#tpu.dimension_semantics<parallel>], iteration_bounds = array<i64: 1>, scalar_prefetch = 0 : i64, scratch_operands = 0 : i64, tpu.core_type = #tpu.core_type<tc>, window_params = [{transform_indices = @transform_0, window_bounds = array<i64: 256, 128>}, {pipeline_mode = #tpu.pipeline_mode<synchronous>, transform_indices = @transform_1, window_bounds = array<i64: 3, 128, 128>}, {pipeline_mode = #tpu.pipeline_mode<synchronous>, transform_indices = @transform_2, window_bounds = array<i64: 3, 1, 128>}, {pipeline_mode = #tpu.pipeline_mode<synchronous>, transform_indices = @transform_3, window_bounds = array<i64: 3, 128, 128>}, {transform_indices = @transform_4, window_bounds = array<i64: 256, 128>}]} {
    %c0 = arith.constant 0 : index
    %c0_0 = arith.constant 0 : index
    %0 = vector.load %arg1[%c0, %c0_0] : memref<256x128xbf16, #tpu.memory_space<vmem>>, vector<128x128xbf16>
    %c128 = arith.constant 128 : index
    %c0_1 = arith.constant 0 : index
    %1 = vector.load %arg1[%c128, %c0_1] : memref<256x128xbf16, #tpu.memory_space<vmem>>, vector<128x128xbf16>
    %c0_2 = arith.constant 0 : index
    %c0_3 = arith.constant 0 : index
    %c0_4 = arith.constant 0 : index
    %2 = vector.load %arg2[%c0_2, %c0_3, %c0_4] : memref<3x128x128xbf16, #tpu.memory_space<vmem>>, vector<1x128x128xbf16>
    %3 = vector.shape_cast %2 : vector<1x128x128xbf16> to vector<128x128xbf16>
    %cst = arith.constant dense<0.000000e+00> : vector<128x128xf32>
    %4 = tpu.matmul %0, %3, %cst {dimension_numbers = #tpu.dot_dimension_numbers<[1], [0], [0], [1], [0, 0, 1, 1], [], []>} : vector<128x128xbf16>, vector<128x128xbf16>, vector<128x128xf32> -> vector<128x128xf32>
    %c0_5 = arith.constant 0 : index
    %c0_6 = arith.constant 0 : index
    %c0_7 = arith.constant 0 : index
    %5 = vector.load %arg2[%c0_5, %c0_6, %c0_7] : memref<3x128x128xbf16, #tpu.memory_space<vmem>>, vector<1x128x128xbf16>
    %6 = vector.shape_cast %5 : vector<1x128x128xbf16> to vector<128x128xbf16>
    %cst_8 = arith.constant dense<0.000000e+00> : vector<128x128xf32>
    %7 = tpu.matmul %1, %6, %cst_8 {dimension_numbers = #tpu.dot_dimension_numbers<[1], [0], [0], [1], [0, 0, 1, 1], [], []>} : vector<128x128xbf16>, vector<128x128xbf16>, vector<128x128xf32> -> vector<128x128xf32>
    %c0_9 = arith.constant 0 : index
    %c0_10 = arith.constant 0 : index
    %c0_11 = arith.constant 0 : index
    %8 = vector.load %arg3[%c0_9, %c0_10, %c0_11] : memref<3x1x128xf32, #tpu.memory_space<vmem>>, vector<1x1x128xf32>
    %9 = vector.shape_cast %8 : vector<1x1x128xf32> to vector<1x128xf32>
    %10 = vector.broadcast %9 : vector<1x128xf32> to vector<128x128xf32>
    %11 = arith.addf %4, %10 : vector<128x128xf32>
    %c0_12 = arith.constant 0 : index
    %c0_13 = arith.constant 0 : index
    %c0_14 = arith.constant 0 : index
    %12 = vector.load %arg3[%c0_12, %c0_13, %c0_14] : memref<3x1x128xf32, #tpu.memory_space<vmem>>, vector<1x1x128xf32>
    %13 = vector.shape_cast %12 : vector<1x1x128xf32> to vector<1x128xf32>
    %14 = vector.broadcast %13 : vector<1x128xf32> to vector<128x128xf32>
    %15 = arith.addf %7, %14 : vector<128x128xf32>
    %16 = arith.truncf %11 : vector<128x128xf32> to vector<128x128xbf16>
    %c1 = arith.constant 1 : index
    %c0_15 = arith.constant 0 : index
    %c0_16 = arith.constant 0 : index
    %17 = vector.load %arg2[%c1, %c0_15, %c0_16] : memref<3x128x128xbf16, #tpu.memory_space<vmem>>, vector<1x128x128xbf16>
    %18 = vector.shape_cast %17 : vector<1x128x128xbf16> to vector<128x128xbf16>
    %cst_17 = arith.constant dense<0.000000e+00> : vector<128x128xf32>
    %19 = tpu.matmul %16, %18, %cst_17 {dimension_numbers = #tpu.dot_dimension_numbers<[1], [0], [0], [1], [0, 0, 1, 1], [], []>} : vector<128x128xbf16>, vector<128x128xbf16>, vector<128x128xf32> -> vector<128x128xf32>
    %20 = arith.truncf %15 : vector<128x128xf32> to vector<128x128xbf16>
    %c1_18 = arith.constant 1 : index
    %c0_19 = arith.constant 0 : index
    %c0_20 = arith.constant 0 : index
    %21 = vector.load %arg2[%c1_18, %c0_19, %c0_20] : memref<3x128x128xbf16, #tpu.memory_space<vmem>>, vector<1x128x128xbf16>
    %22 = vector.shape_cast %21 : vector<1x128x128xbf16> to vector<128x128xbf16>
    %cst_21 = arith.constant dense<0.000000e+00> : vector<128x128xf32>
    %23 = tpu.matmul %20, %22, %cst_21 {dimension_numbers = #tpu.dot_dimension_numbers<[1], [0], [0], [1], [0, 0, 1, 1], [], []>} : vector<128x128xbf16>, vector<128x128xbf16>, vector<128x128xf32> -> vector<128x128xf32>
    %c1_22 = arith.constant 1 : index
    %c0_23 = arith.constant 0 : index
    %c0_24 = arith.constant 0 : index
    %24 = vector.load %arg3[%c1_22, %c0_23, %c0_24] : memref<3x1x128xf32, #tpu.memory_space<vmem>>, vector<1x1x128xf32>
    %25 = vector.shape_cast %24 : vector<1x1x128xf32> to vector<1x128xf32>
    %26 = vector.broadcast %25 : vector<1x128xf32> to vector<128x128xf32>
    %27 = arith.addf %19, %26 : vector<128x128xf32>
    %c1_25 = arith.constant 1 : index
    %c0_26 = arith.constant 0 : index
    %c0_27 = arith.constant 0 : index
    %28 = vector.load %arg3[%c1_25, %c0_26, %c0_27] : memref<3x1x128xf32, #tpu.memory_space<vmem>>, vector<1x1x128xf32>
    %29 = vector.shape_cast %28 : vector<1x1x128xf32> to vector<1x128xf32>
    %30 = vector.broadcast %29 : vector<1x128xf32> to vector<128x128xf32>
    %31 = arith.addf %23, %30 : vector<128x128xf32>
    %32 = arith.truncf %27 : vector<128x128xf32> to vector<128x128xbf16>
    %c2 = arith.constant 2 : index
    %c0_28 = arith.constant 0 : index
    %c0_29 = arith.constant 0 : index
    %33 = vector.load %arg2[%c2, %c0_28, %c0_29] : memref<3x128x128xbf16, #tpu.memory_space<vmem>>, vector<1x128x128xbf16>
    %34 = vector.shape_cast %33 : vector<1x128x128xbf16> to vector<128x128xbf16>
    %cst_30 = arith.constant dense<0.000000e+00> : vector<128x128xf32>
    %35 = tpu.matmul %32, %34, %cst_30 {dimension_numbers = #tpu.dot_dimension_numbers<[1], [0], [0], [1], [0, 0, 1, 1], [], []>} : vector<128x128xbf16>, vector<128x128xbf16>, vector<128x128xf32> -> vector<128x128xf32>
    %36 = arith.truncf %31 : vector<128x128xf32> to vector<128x128xbf16>
    %c2_31 = arith.constant 2 : index
    %c0_32 = arith.constant 0 : index
    %c0_33 = arith.constant 0 : index
    %37 = vector.load %arg2[%c2_31, %c0_32, %c0_33] : memref<3x128x128xbf16, #tpu.memory_space<vmem>>, vector<1x128x128xbf16>
    %38 = vector.shape_cast %37 : vector<1x128x128xbf16> to vector<128x128xbf16>
    %cst_34 = arith.constant dense<0.000000e+00> : vector<128x128xf32>
    %39 = tpu.matmul %36, %38, %cst_34 {dimension_numbers = #tpu.dot_dimension_numbers<[1], [0], [0], [1], [0, 0, 1, 1], [], []>} : vector<128x128xbf16>, vector<128x128xbf16>, vector<128x128xf32> -> vector<128x128xf32>
    %40 = arith.truncf %35 : vector<128x128xf32> to vector<128x128xbf16>
    %c2_35 = arith.constant 2 : index
    %c0_36 = arith.constant 0 : index
    %c0_37 = arith.constant 0 : index
    %41 = vector.load %arg4[%c2_35, %c0_36, %c0_37] : memref<3x128x128xbf16, #tpu.memory_space<vmem>>, vector<1x128x128xbf16>
    %42 = vector.shape_cast %41 : vector<1x128x128xbf16> to vector<128x128xbf16>
    %cst_38 = arith.constant dense<0.000000e+00> : vector<128x128xf32>
    %43 = tpu.matmul %40, %42, %cst_38 {dimension_numbers = #tpu.dot_dimension_numbers<[1], [0], [0], [1], [0, 0, 1, 1], [], []>} : vector<128x128xbf16>, vector<128x128xbf16>, vector<128x128xf32> -> vector<128x128xf32>
    %44 = arith.truncf %39 : vector<128x128xf32> to vector<128x128xbf16>
    %c2_39 = arith.constant 2 : index
    %c0_40 = arith.constant 0 : index
    %c0_41 = arith.constant 0 : index
    %45 = vector.load %arg4[%c2_39, %c0_40, %c0_41] : memref<3x128x128xbf16, #tpu.memory_space<vmem>>, vector<1x128x128xbf16>
    %46 = vector.shape_cast %45 : vector<1x128x128xbf16> to vector<128x128xbf16>
    %cst_42 = arith.constant dense<0.000000e+00> : vector<128x128xf32>
    %47 = tpu.matmul %44, %46, %cst_42 {dimension_numbers = #tpu.dot_dimension_numbers<[1], [0], [0], [1], [0, 0, 1, 1], [], []>} : vector<128x128xbf16>, vector<128x128xbf16>, vector<128x128xf32> -> vector<128x128xf32>
    %c1_43 = arith.constant 1 : index
    %c0_44 = arith.constant 0 : index
    %c0_45 = arith.constant 0 : index
    %48 = vector.load %arg3[%c1_43, %c0_44, %c0_45] : memref<3x1x128xf32, #tpu.memory_space<vmem>>, vector<1x1x128xf32>
    %49 = vector.shape_cast %48 : vector<1x1x128xf32> to vector<1x128xf32>
    %50 = vector.broadcast %49 : vector<1x128xf32> to vector<128x128xf32>
    %51 = arith.subf %43, %50 : vector<128x128xf32>
    %c1_46 = arith.constant 1 : index
    %c0_47 = arith.constant 0 : index
    %c0_48 = arith.constant 0 : index
    %52 = vector.load %arg3[%c1_46, %c0_47, %c0_48] : memref<3x1x128xf32, #tpu.memory_space<vmem>>, vector<1x1x128xf32>
    %53 = vector.shape_cast %52 : vector<1x1x128xf32> to vector<1x128xf32>
    %54 = vector.broadcast %53 : vector<1x128xf32> to vector<128x128xf32>
    %55 = arith.subf %47, %54 : vector<128x128xf32>
    %56 = arith.truncf %51 : vector<128x128xf32> to vector<128x128xbf16>
    %c1_49 = arith.constant 1 : index
    %c0_50 = arith.constant 0 : index
    %c0_51 = arith.constant 0 : index
    %57 = vector.load %arg4[%c1_49, %c0_50, %c0_51] : memref<3x128x128xbf16, #tpu.memory_space<vmem>>, vector<1x128x128xbf16>
    %58 = vector.shape_cast %57 : vector<1x128x128xbf16> to vector<128x128xbf16>
    %cst_52 = arith.constant dense<0.000000e+00> : vector<128x128xf32>
    %59 = tpu.matmul %56, %58, %cst_52 {dimension_numbers = #tpu.dot_dimension_numbers<[1], [0], [0], [1], [0, 0, 1, 1], [], []>} : vector<128x128xbf16>, vector<128x128xbf16>, vector<128x128xf32> -> vector<128x128xf32>
    %60 = arith.truncf %55 : vector<128x128xf32> to vector<128x128xbf16>
    %c1_53 = arith.constant 1 : index
    %c0_54 = arith.constant 0 : index
    %c0_55 = arith.constant 0 : index
    %61 = vector.load %arg4[%c1_53, %c0_54, %c0_55] : memref<3x128x128xbf16, #tpu.memory_space<vmem>>, vector<1x128x128xbf16>
    %62 = vector.shape_cast %61 : vector<1x128x128xbf16> to vector<128x128xbf16>
    %cst_56 = arith.constant dense<0.000000e+00> : vector<128x128xf32>
    %63 = tpu.matmul %60, %62, %cst_56 {dimension_numbers = #tpu.dot_dimension_numbers<[1], [0], [0], [1], [0, 0, 1, 1], [], []>} : vector<128x128xbf16>, vector<128x128xbf16>, vector<128x128xf32> -> vector<128x128xf32>
    %c0_57 = arith.constant 0 : index
    %c0_58 = arith.constant 0 : index
    %c0_59 = arith.constant 0 : index
    %64 = vector.load %arg3[%c0_57, %c0_58, %c0_59] : memref<3x1x128xf32, #tpu.memory_space<vmem>>, vector<1x1x128xf32>
    %65 = vector.shape_cast %64 : vector<1x1x128xf32> to vector<1x128xf32>
    %66 = vector.broadcast %65 : vector<1x128xf32> to vector<128x128xf32>
    %67 = arith.subf %59, %66 : vector<128x128xf32>
    %c0_60 = arith.constant 0 : index
    %c0_61 = arith.constant 0 : index
    %c0_62 = arith.constant 0 : index
    %68 = vector.load %arg3[%c0_60, %c0_61, %c0_62] : memref<3x1x128xf32, #tpu.memory_space<vmem>>, vector<1x1x128xf32>
    %69 = vector.shape_cast %68 : vector<1x1x128xf32> to vector<1x128xf32>
    %70 = vector.broadcast %69 : vector<1x128xf32> to vector<128x128xf32>
    %71 = arith.subf %63, %70 : vector<128x128xf32>
    %72 = arith.truncf %67 : vector<128x128xf32> to vector<128x128xbf16>
    %c0_63 = arith.constant 0 : index
    %c0_64 = arith.constant 0 : index
    %c0_65 = arith.constant 0 : index
    %73 = vector.load %arg4[%c0_63, %c0_64, %c0_65] : memref<3x128x128xbf16, #tpu.memory_space<vmem>>, vector<1x128x128xbf16>
    %74 = vector.shape_cast %73 : vector<1x128x128xbf16> to vector<128x128xbf16>
    %cst_66 = arith.constant dense<0.000000e+00> : vector<128x128xf32>
    %75 = tpu.matmul %72, %74, %cst_66 {dimension_numbers = #tpu.dot_dimension_numbers<[1], [0], [0], [1], [0, 0, 1, 1], [], []>} : vector<128x128xbf16>, vector<128x128xbf16>, vector<128x128xf32> -> vector<128x128xf32>
    %76 = arith.truncf %71 : vector<128x128xf32> to vector<128x128xbf16>
    %c0_67 = arith.constant 0 : index
    %c0_68 = arith.constant 0 : index
    %c0_69 = arith.constant 0 : index
    %77 = vector.load %arg4[%c0_67, %c0_68, %c0_69] : memref<3x128x128xbf16, #tpu.memory_space<vmem>>, vector<1x128x128xbf16>
    %78 = vector.shape_cast %77 : vector<1x128x128xbf16> to vector<128x128xbf16>
    %cst_70 = arith.constant dense<0.000000e+00> : vector<128x128xf32>
    %79 = tpu.matmul %76, %78, %cst_70 {dimension_numbers = #tpu.dot_dimension_numbers<[1], [0], [0], [1], [0, 0, 1, 1], [], []>} : vector<128x128xbf16>, vector<128x128xbf16>, vector<128x128xf32> -> vector<128x128xf32>
    %c0_71 = arith.constant 0 : index
    %c0_72 = arith.constant 0 : index
    %80 = vector.load %arg5[%c0_71, %c0_72] : memref<256x128xf32, #tpu.memory_space<vmem>>, vector<128x128xf32>
    tpu.vector_store %arg5[%c0_71, %c0_72], %75 {strides = array<i32>} : memref<256x128xf32, #tpu.memory_space<vmem>>, vector<128x128xf32>,
    %c128_73 = arith.constant 128 : index
    %c0_74 = arith.constant 0 : index
    %81 = vector.load %arg5[%c128_73, %c0_74] : memref<256x128xf32, #tpu.memory_space<vmem>>, vector<128x128xf32>
    tpu.vector_store %arg5[%c128_73, %c0_74], %79 {strides = array<i32>} : memref<256x128xf32, #tpu.memory_space<vmem>>, vector<128x128xf32>,
    return
  }
  func.func @transform_0(%arg0: i32) -> (i32, i32) {
    %c0_i32 = arith.constant 0 : i32
    %c0_i32_0 = arith.constant 0 : i32
    return %arg0, %c0_i32 : i32, i32
  }
  func.func @transform_1(%arg0: i32) -> (i32, i32, i32) {
    %c0_i32 = arith.constant 0 : i32
    %c0_i32_0 = arith.constant 0 : i32
    %c0_i32_1 = arith.constant 0 : i32
    %c0_i32_2 = arith.constant 0 : i32
    return %c0_i32, %c0_i32_0, %c0_i32_1 : i32, i32, i32
  }
  func.func @transform_2(%arg0: i32) -> (i32, i32, i32) {
    %c0_i32 = arith.constant 0 : i32
    %c0_i32_0 = arith.constant 0 : i32
    %c0_i32_1 = arith.constant 0 : i32
    %c0_i32_2 = arith.constant 0 : i32
    return %c0_i32, %c0_i32_0, %c0_i32_1 : i32, i32, i32
  }
  func.func @transform_3(%arg0: i32) -> (i32, i32, i32) {
    %c0_i32 = arith.constant 0 : i32
    %c0_i32_0 = arith.constant 0 : i32
    %c0_i32_1 = arith.constant 0 : i32
    %c0_i32_2 = arith.constant 0 : i32
    return %c0_i32, %c0_i32_0, %c0_i32_1 : i32, i32, i32
  }
  func.func @transform_4(%arg0: i32) -> (i32, i32) {
    %c0_i32 = arith.constant 0 : i32
    %c0_i32_0 = arith.constant 0 : i32
    return %arg0, %c0_i32 : i32, i32
  }
}

</mosaic_0001>

<llo_original>
// kernel: tpu_custom_call.1
$region0: #{tpu_custom_call.1}
  #allocation0 [shape = 'u32[]', space=smem, size = 0x4, offset = 0x4, fixed_abs, tag = 'smem constant byte address 0x4 - core index']
  #allocation1 [shape = 'u32[72,128]{1,0:T(1,128)}', space=vmem, size = 0x9000, scoped, tag = 'internal scratch']
  %s0 = inlined_call_operand.hbm [shape: bf16[256,128], index: 0, kind: input, shape index: {}]
  %s1 = inlined_call_operand.hbm [shape: bf16[3,128,128], index: 1, kind: input, shape index: {}]
  %s2 = inlined_call_operand.hbm [shape: f32[3,1,128], index: 2, kind: input, shape index: {}]
  %s3 = inlined_call_operand.hbm [shape: bf16[3,128,128], index: 3, kind: input, shape index: {}]
  %s4 = inlined_call_operand.hbm [shape: f32[256,128], index: 4, kind: output, shape index: {}]
  %s5 = sld [smem:[#allocation0]]
  $region42: #{tpu_custom_call.1} parent=0
    _
  %s7 = ssub.s32 1, %s5
  %s8 = scalar_select 0, %s7, %s5
  $region1: #{tpu_custom_call.1} parent=0
    #allocation2 [shape = 'u8[65536]{0}', space=vmem, size = 0x10000, scoped, tag = 'input window, operand 0, single buffered']
    #allocation3 [shape = 's32[1]{0}', space=sflag, size = 0x4, scoped, tag = 'scoped memory for tpu_custom_call.1']
    #allocation4 [shape = 's32[1]{0}', space=sflag, size = 0x4, scoped, tag = 'scoped memory for tpu_custom_call.1']
    #allocation5 [shape = 'u8[98304]{0}', space=vmem, size = 0x18000, scoped, tag = 'input window, operand 1, single buffered']
    #allocation6 [shape = 's32[1]{0}', space=sflag, size = 0x4, scoped, tag = 'scoped memory for tpu_custom_call.1']
    #allocation7 [shape = 'u8[1536]{0}', space=vmem, size = 0x800, scoped, tag = 'input window, operand 2, single buffered']
    #allocation8 [shape = 'u8[98304]{0}', space=vmem, size = 0x18000, scoped, tag = 'input window, operand 3, single buffered']
    #allocation9 [shape = 's32[1]{0}', space=sflag, size = 0x4, scoped, tag = 'scoped memory for tpu_custom_call.1']
    #allocation10 [shape = 'u8[131072]{0}', space=vmem, size = 0x20000, scoped, tag = 'output window, operand 0, single buffered']
    %9 = vsyncpa [#allocation3], 0
    %10 = vsyncpa [#allocation6], 0
    %11 = vsyncpa [#allocation9], 0
    %12 = vsyncpa [#allocation4], 0
    // Predicated region
    $region2: #{tpu_custom_call.1} parent=1 // pred_check
      _
    $region3: #{tpu_custom_call.1} parent=1 // pred_check_branch
      %14 = sbr.rel (0) target = $region5
    $region4: #{tpu_custom_call.1} parent=1 // pred_region
      %16 = vsyncadd [#allocation3], 0
      %s17 = sshll.u32 %s0, 4
      %s18 = int_to_ptr.hbm [resolvable:$true] %s17
      %s19 = sshll.u32 [#allocation2], 4
      %s20 = int_to_ptr.vmem [resolvable:$true] %s19
      %25 = dma.hbm_to_vmem [thread:$0]  %s18, 2048, %s20, [#allocation3], 64, 64, 4
    $region5: #{tpu_custom_call.1} parent=1 // pred_fallthru
      _
    // Predicated region
    $region6: #{tpu_custom_call.1} parent=1 // pred_check
      _
    $region7: #{tpu_custom_call.1} parent=1 // pred_check_branch
      %27 = sbr.rel (0) target = $region9
    $region8: #{tpu_custom_call.1} parent=1 // pred_region
      %29 = vsyncadd [#allocation6], 0
      %s30 = sshll.u32 %s1, 4
      %s31 = int_to_ptr.hbm [resolvable:$true] %s30
      %s32 = sshll.u32 [#allocation5], 4
      %s33 = int_to_ptr.vmem [resolvable:$true] %s32
      %38 = dma.hbm_to_vmem [thread:$0]  %s31, 3072, %s33, [#allocation6], 64, 64, 4
    $region9: #{tpu_custom_call.1} parent=1 // pred_fallthru
      _
    // Predicated region
    $region10: #{tpu_custom_call.1} parent=1 // pred_check
      _
    $region11: #{tpu_custom_call.1} parent=1 // pred_check_branch
      %40 = sbr.rel (0) target = $region13
    $region12: #{tpu_custom_call.1} parent=1 // pred_region
      %42 = vsyncadd [#allocation6], 0
      %s43 = sshll.u32 %s2, 4
      %s44 = int_to_ptr.hbm [resolvable:$true] %s43
      %s45 = sshll.u32 [#allocation7], 4
      %s46 = int_to_ptr.vmem [resolvable:$true] %s45
      %51 = dma.hbm_to_vmem [thread:$0]  %s44, 48, %s46, [#allocation6], 16, 16, 1
    $region13: #{tpu_custom_call.1} parent=1 // pred_fallthru
      _
    // Predicated region
    $region14: #{tpu_custom_call.1} parent=1 // pred_check
      _
    $region15: #{tpu_custom_call.1} parent=1 // pred_check_branch
      %53 = sbr.rel (0) target = $region17
    $region16: #{tpu_custom_call.1} parent=1 // pred_region
      %55 = vsyncadd [#allocation9], 0
      %s56 = sshll.u32 %s3, 4
      %s57 = int_to_ptr.hbm [resolvable:$true] %s56
      %s58 = sshll.u32 [#allocation8], 4
      %s59 = int_to_ptr.vmem [resolvable:$true] %s58
      %64 = dma.hbm_to_vmem [thread:$0]  %s57, 3072, %s59, [#allocation9], 64, 64, 4
    $region17: #{tpu_custom_call.1} parent=1 // pred_fallthru
      _
    // Predicated region
    $region18: #{tpu_custom_call.1} parent=1 // pred_check
      _
    $region19: #{tpu_custom_call.1} parent=1 // pred_check_branch
      %66 = sbr.rel (0) target = $region21
    $region20: #{tpu_custom_call.1} parent=1 // pred_region
      %68 = dma.done [#allocation3], 2048
    $region21: #{tpu_custom_call.1} parent=1 // pred_fallthru
      _
    // Predicated region
    $region22: #{tpu_custom_call.1} parent=1 // pred_check
      _
    $region23: #{tpu_custom_call.1} parent=1 // pred_check_branch
      %70 = sbr.rel (0) target = $region25
    $region24: #{tpu_custom_call.1} parent=1 // pred_region
      %72 = dma.done [#allocation6], 3072
    $region25: #{tpu_custom_call.1} parent=1 // pred_fallthru
      _
    // Predicated region
    $region26: #{tpu_custom_call.1} parent=1 // pred_check
      _
    $region27: #{tpu_custom_call.1} parent=1 // pred_check_branch
      %74 = sbr.rel (0) target = $region29
    $region28: #{tpu_custom_call.1} parent=1 // pred_region
      %76 = dma.done [#allocation6], 48
    $region29: #{tpu_custom_call.1} parent=1 // pred_fallthru
      _
    // Predicated region
    $region30: #{tpu_custom_call.1} parent=1 // pred_check
      _
    $region31: #{tpu_custom_call.1} parent=1 // pred_check_branch
      %78 = sbr.rel (0) target = $region33
    $region32: #{tpu_custom_call.1} parent=1 // pred_region
      %80 = dma.done [#allocation9], 3072
    $region33: #{tpu_custom_call.1} parent=1 // pred_fallthru
      _
    %v81 = vld [vmem:[#allocation2] sm:$0xf]
    %v82 = vld [vmem:[#allocation2 + $0x4] sm:$0xf]
    %v83 = vld [vmem:[#allocation2 + $0x8] sm:$0xf]
    %v84 = vld [vmem:[#allocation2 + $0xc] sm:$0xf]
    %v85 = vld [vmem:[#allocation2 + $0x10] sm:$0xf]
    %v86 = vld [vmem:[#allocation2 + $0x14] sm:$0xf]
    %v87 = vld [vmem:[#allocation2 + $0x18] sm:$0xf]
    %v88 = vld [vmem:[#allocation2 + $0x1c] sm:$0xf]
    %v89 = vld [vmem:[#allocation2 + $0x20] sm:$0xf]
    %v90 = vld [vmem:[#allocation2 + $0x24] sm:$0xf]
    %v91 = vld [vmem:[#allocation2 + $0x28] sm:$0xf]
    %v92 = vld [vmem:[#allocation2 + $0x2c] sm:$0xf]
    %v93 = vld [vmem:[#allocation2 + $0x30] sm:$0xf]
    %v94 = vld [vmem:[#allocation2 + $0x34] sm:$0xf]
    %v95 = vld [vmem:[#allocation2 + $0x38] sm:$0xf]
    %v96 = vld [vmem:[#allocation2 + $0x3c] sm:$0xf]
    %v97 = vld [vmem:[#allocation2 + $0x40] sm:$0xf]
    %v98 = vld [vmem:[#allocation2 + $0x44] sm:$0xf]
    %v99 = vld [vmem:[#allocation2 + $0x48] sm:$0xf]
    %v100 = vld [vmem:[#allocation2 + $0x4c] sm:$0xf]
    %v101 = vld [vmem:[#allocation2 + $0x50] sm:$0xf]
    %v102 = vld [vmem:[#allocation2 + $0x54] sm:$0xf]
    %v103 = vld [vmem:[#allocation2 + $0x58] sm:$0xf]
    %v104 = vld [vmem:[#allocation2 + $0x5c] sm:$0xf]
    %v105 = vld [vmem:[#allocation2 + $0x60] sm:$0xf]
    %v106 = vld [vmem:[#allocation2 + $0x64] sm:$0xf]
    %v107 = vld [vmem:[#allocation2 + $0x68] sm:$0xf]
    %v108 = vld [vmem:[#allocation2 + $0x6c] sm:$0xf]
    %v109 = vld [vmem:[#allocation2 + $0x70] sm:$0xf]
    %v110 = vld [vmem:[#allocation2 + $0x74] sm:$0xf]
    %v111 = vld [vmem:[#allocation2 + $0x78] sm:$0xf]
    %v112 = vld [vmem:[#allocation2 + $0x7c] sm:$0xf]
    %v113 = vld [vmem:[#allocation5] sm:$0xf]
    %v114 = vld [vmem:[#allocation5 + $0x4] sm:$0xf]
    %v115 = vld [vmem:[#allocation5 + $0x8] sm:$0xf]
    %v116 = vld [vmem:[#allocation5 + $0xc] sm:$0xf]
    %v117 = vld [vmem:[#allocation5 + $0x10] sm:$0xf]
    %v118 = vld [vmem:[#allocation5 + $0x14] sm:$0xf]
    %v119 = vld [vmem:[#allocation5 + $0x18] sm:$0xf]
    %v120 = vld [vmem:[#allocation5 + $0x1c] sm:$0xf]
    %v121 = vld [vmem:[#allocation5 + $0x20] sm:$0xf]
    %v122 = vld [vmem:[#allocation5 + $0x24] sm:$0xf]
    %v123 = vld [vmem:[#allocation5 + $0x28] sm:$0xf]
    %v124 = vld [vmem:[#allocation5 + $0x2c] sm:$0xf]
    %v125 = vld [vmem:[#allocation5 + $0x30] sm:$0xf]
    %v126 = vld [vmem:[#allocation5 + $0x34] sm:$0xf]
    %v127 = vld [vmem:[#allocation5 + $0x38] sm:$0xf]
    %v128 = vld [vmem:[#allocation5 + $0x3c] sm:$0xf]
    %v129 = vld [vmem:[#allocation7] sm:$0x1]
    %v131 = vperm.slane %v129, 0
    %v149 = vunpack.c.l.b16 %v81
    %v150 = vunpack.c.l.b16 %v82
    %v151 = vunpack.c.l.b16 %v83
    %v152 = vunpack.c.l.b16 %v84
    %v153 = vunpack.c.l.b16 %v85
    %v154 = vunpack.c.l.b16 %v86
    %v155 = vunpack.c.l.b16 %v87
    %v156 = vunpack.c.l.b16 %v88
    %v157 = vunpack.c.l.b16 %v89
    %v158 = vunpack.c.l.b16 %v90
    %v159 = vunpack.c.l.b16 %v91
    %v160 = vunpack.c.l.b16 %v92
    %v161 = vunpack.c.l.b16 %v93
    %v162 = vunpack.c.l.b16 %v94
    %v163 = vunpack.c.l.b16 %v95
    %v164 = vunpack.c.l.b16 %v96
    %v165 = vpack.c.b16 %v150, %v149
    %v166 = vpack.c.b16 %v152, %v151
    %v167 = vpack.c.b16 %v154, %v153
    %v168 = vpack.c.b16 %v156, %v155
    %v169 = vpack.c.b16 %v158, %v157
    %v170 = vpack.c.b16 %v160, %v159
    %v171 = vpack.c.b16 %v162, %v161
    %v172 = vpack.c.b16 %v164, %v163
    %v197 = vunpack.c.l.b16 %v113
    %v198 = vunpack.c.l.b16 %v114
    %v199 = vunpack.c.l.b16 %v115
    %v200 = vunpack.c.l.b16 %v116
    %v201 = vunpack.c.l.b16 %v117
    %v202 = vunpack.c.l.b16 %v118
    %v203 = vunpack.c.l.b16 %v119
    %v204 = vunpack.c.l.b16 %v120
    %v205 = vunpack.c.l.b16 %v121
    %v206 = vunpack.c.l.b16 %v122
    %v207 = vunpack.c.l.b16 %v123
    %v208 = vunpack.c.l.b16 %v124
    %v209 = vunpack.c.l.b16 %v125
    %v210 = vunpack.c.l.b16 %v126
    %v211 = vunpack.c.l.b16 %v127
    %v212 = vunpack.c.l.b16 %v128
    %v213 = vpack.c.b16 %v198, %v197
    %v214 = vpack.c.b16 %v200, %v199
    %v215 = vpack.c.b16 %v202, %v201
    %v216 = vpack.c.b16 %v204, %v203
    %v217 = vpack.c.b16 %v206, %v205
    %v218 = vpack.c.b16 %v208, %v207
    %v219 = vpack.c.b16 %v210, %v209
    %v220 = vpack.c.b16 %v212, %v211
    %229 = vmatpush.bf16.msra.mxu0 %v220
    %230 = vmatpush.bf16.msra.mxu0 %v219
    %231 = vmatpush.bf16.msra.mxu0 %v218
    %232 = vmatpush.bf16.msra.mxu0 %v217
    %233 = vmatpush.bf16.msra.mxu0 %v216
    %234 = vmatpush.bf16.msra.mxu0 %v215
    %235 = vmatpush.bf16.msra.mxu0 %v214
    %236 = vmatpush.bf16.msra.mxu0 %v213
    %237 = vmatmul.bf16.gmra.mxu0 %v165
    %v238 = vpop.f32.mrf.mxu0
    %v239 = vadd.f32 %v131, %v238
    %v240 = vpop.f32.mrf.mxu0
    %v241 = vadd.f32 %v131, %v240
    %242 = vmatmul.bf16.gmra.mxu0 %v166
    %v243 = vpop.f32.mrf.mxu0
    %v244 = vadd.f32 %v131, %v243
    %v245 = vpop.f32.mrf.mxu0
    %v246 = vadd.f32 %v131, %v245
    %247 = vmatmul.bf16.gmra.mxu0 %v167
    %v248 = vpop.f32.mrf.mxu0
    %v249 = vadd.f32 %v131, %v248
    %v250 = vpop.f32.mrf.mxu0
    %v251 = vadd.f32 %v131, %v250
    %252 = vmatmul.bf16.gmra.mxu0 %v168
    %v253 = vpop.f32.mrf.mxu0
    %v254 = vadd.f32 %v131, %v253
    %v255 = vpop.f32.mrf.mxu0
    %v256 = vadd.f32 %v131, %v255
    %257 = vmatmul.bf16.gmra.mxu0 %v169
    %v258 = vpop.f32.mrf.mxu0
    %v259 = vadd.f32 %v131, %v258
    %v260 = vpop.f32.mrf.mxu0
    %v261 = vadd.f32 %v131, %v260
    %262 = vmatmul.bf16.gmra.mxu0 %v170
    %v263 = vpop.f32.mrf.mxu0
    %v264 = vadd.f32 %v131, %v263
    %v265 = vpop.f32.mrf.mxu0
    %v266 = vadd.f32 %v131, %v265
    %267 = vmatmul.bf16.gmra.mxu0 %v171
    %v268 = vpop.f32.mrf.mxu0
    %v269 = vadd.f32 %v131, %v268
    %v270 = vpop.f32.mrf.mxu0
    %v271 = vadd.f32 %v131, %v270
    %272 = vmatmul.bf16.gmra.mxu0 %v172
    %v273 = vpop.f32.mrf.mxu0
    %v274 = vadd.f32 %v131, %v273
    %v275 = vpop.f32.mrf.mxu0
    %v276 = vadd.f32 %v131, %v275
    %277 = vdwg.mxu0
    %v294 = vunpack.c.l.b16 %v97
    %v295 = vunpack.c.l.b16 %v98
    %v296 = vunpack.c.l.b16 %v99
    %v297 = vunpack.c.l.b16 %v100
    %v298 = vunpack.c.l.b16 %v101
    %v299 = vunpack.c.l.b16 %v102
    %v300 = vunpack.c.l.b16 %v103
    %v301 = vunpack.c.l.b16 %v104
    %v302 = vunpack.c.l.b16 %v105
    %v303 = vunpack.c.l.b16 %v106
    %v304 = vunpack.c.l.b16 %v107
    %v305 = vunpack.c.l.b16 %v108
    %v306 = vunpack.c.l.b16 %v109
    %v307 = vunpack.c.l.b16 %v110
    %v308 = vunpack.c.l.b16 %v111
    %v309 = vunpack.c.l.b16 %v112
    %v310 = vpack.c.b16 %v295, %v294
    %v311 = vpack.c.b16 %v297, %v296
    %v312 = vpack.c.b16 %v299, %v298
    %v313 = vpack.c.b16 %v301, %v300
    %v314 = vpack.c.b16 %v303, %v302
    %v315 = vpack.c.b16 %v305, %v304
    %v316 = vpack.c.b16 %v307, %v306
    %v317 = vpack.c.b16 %v309, %v308
    %326 = vmatpush.bf16.msra.mxu0 %v220
    %327 = vmatpush.bf16.msra.mxu0 %v219
    %328 = vmatpush.bf16.msra.mxu0 %v218
    %329 = vmatpush.bf16.msra.mxu0 %v217
    %330 = vmatpush.bf16.msra.mxu0 %v216
    %331 = vmatpush.bf16.msra.mxu0 %v215
    %332 = vmatpush.bf16.msra.mxu0 %v214
    %333 = vmatpush.bf16.msra.mxu0 %v213
    %334 = vmatmul.bf16.gmra.mxu0 %v310
    %v335 = vpop.f32.mrf.mxu0
    %v336 = vadd.f32 %v131, %v335
    %v337 = vpop.f32.mrf.mxu0
    %v338 = vadd.f32 %v131, %v337
    %339 = vmatmul.bf16.gmra.mxu0 %v311
    %v340 = vpop.f32.mrf.mxu0
    %v341 = vadd.f32 %v131, %v340
    %v342 = vpop.f32.mrf.mxu0
    %v343 = vadd.f32 %v131, %v342
    %344 = vmatmul.bf16.gmra.mxu0 %v312
    %v345 = vpop.f32.mrf.mxu0
    %v346 = vadd.f32 %v131, %v345
    %v347 = vpop.f32.mrf.mxu0
    %v348 = vadd.f32 %v131, %v347
    %349 = vmatmul.bf16.gmra.mxu0 %v313
    %v350 = vpop.f32.mrf.mxu0
    %v351 = vadd.f32 %v131, %v350
    %v352 = vpop.f32.mrf.mxu0
    %v353 = vadd.f32 %v131, %v352
    %354 = vmatmul.bf16.gmra.mxu0 %v314
    %v355 = vpop.f32.mrf.mxu0
    %v356 = vadd.f32 %v131, %v355
    %v357 = vpop.f32.mrf.mxu0
    %v358 = vadd.f32 %v131, %v357
    %359 = vmatmul.bf16.gmra.mxu0 %v315
    %v360 = vpop.f32.mrf.mxu0
    %v361 = vadd.f32 %v131, %v360
    %v362 = vpop.f32.mrf.mxu0
    %v363 = vadd.f32 %v131, %v362
    %364 = vmatmul.bf16.gmra.mxu0 %v316
    %v365 = vpop.f32.mrf.mxu0
    %v366 = vadd.f32 %v131, %v365
    %v367 = vpop.f32.mrf.mxu0
    %v368 = vadd.f32 %v131, %v367
    %369 = vmatmul.bf16.gmra.mxu0 %v317
    %v370 = vpop.f32.mrf.mxu0
    %v371 = vadd.f32 %v131, %v370
    %v372 = vpop.f32.mrf.mxu0
    %v373 = vadd.f32 %v131, %v372
    %374 = vdwg.mxu0
    %v375 = vpack.c.bf16 %v241, %v239
    %v376 = vpack.c.bf16 %v246, %v244
    %v377 = vpack.c.bf16 %v251, %v249
    %v378 = vpack.c.bf16 %v256, %v254
    %v379 = vpack.c.bf16 %v261, %v259
    %v380 = vpack.c.bf16 %v266, %v264
    %v381 = vpack.c.bf16 %v271, %v269
    %v382 = vpack.c.bf16 %v276, %v274
    %s383 = scalar_lea.vmem [#allocation5], 64
    %v384 = vld [vmem:[%s383] sm:$0xf]
    %v385 = vld [vmem:[%s383 + $0x4] sm:$0xf]
    %v386 = vld [vmem:[%s383 + $0x8] sm:$0xf]
    %v387 = vld [vmem:[%s383 + $0xc] sm:$0xf]
    %v388 = vld [vmem:[%s383 + $0x10] sm:$0xf]
    %v389 = vld [vmem:[%s383 + $0x14] sm:$0xf]
    %v390 = vld [vmem:[%s383 + $0x18] sm:$0xf]
    %v391 = vld [vmem:[%s383 + $0x1c] sm:$0xf]
    %v392 = vld [vmem:[%s383 + $0x20] sm:$0xf]
    %v393 = vld [vmem:[%s383 + $0x24] sm:$0xf]
    %v394 = vld [vmem:[%s383 + $0x28] sm:$0xf]
    %v395 = vld [vmem:[%s383 + $0x2c] sm:$0xf]
    %v396 = vld [vmem:[%s383 + $0x30] sm:$0xf]
    %v397 = vld [vmem:[%s383 + $0x34] sm:$0xf]
    %v398 = vld [vmem:[%s383 + $0x38] sm:$0xf]
    %v399 = vld [vmem:[%s383 + $0x3c] sm:$0xf]
    %v400 = vpack.c.bf16 %v338, %v336
    %v401 = vpack.c.bf16 %v343, %v341
    %v402 = vpack.c.bf16 %v348, %v346
    %v403 = vpack.c.bf16 %v353, %v351
    %v404 = vpack.c.bf16 %v358, %v356
    %v405 = vpack.c.bf16 %v363, %v361
    %v406 = vpack.c.bf16 %v368, %v366
    %v407 = vpack.c.bf16 %v373, %v371
    %s408 = scalar_lea.vmem [#allocation7], 1
    %v409 = vld [vmem:[%s408] sm:$0x1]
    %v411 = vperm.slane %v409, 0
    %v429 = vunpack.c.l.b16 %v384
    %v430 = vunpack.c.l.b16 %v385
    %v431 = vunpack.c.l.b16 %v386
    %v432 = vunpack.c.l.b16 %v387
    %v433 = vunpack.c.l.b16 %v388
    %v434 = vunpack.c.l.b16 %v389
    %v435 = vunpack.c.l.b16 %v390
    %v436 = vunpack.c.l.b16 %v391
    %v437 = vunpack.c.l.b16 %v392
    %v438 = vunpack.c.l.b16 %v393
    %v439 = vunpack.c.l.b16 %v394
    %v440 = vunpack.c.l.b16 %v395
    %v441 = vunpack.c.l.b16 %v396
    %v442 = vunpack.c.l.b16 %v397
    %v443 = vunpack.c.l.b16 %v398
    %v444 = vunpack.c.l.b16 %v399
    %v445 = vpack.c.b16 %v430, %v429
    %v446 = vpack.c.b16 %v432, %v431
    %v447 = vpack.c.b16 %v434, %v433
    %v448 = vpack.c.b16 %v436, %v435
    %v449 = vpack.c.b16 %v438, %v437
    %v450 = vpack.c.b16 %v440, %v439
    %v451 = vpack.c.b16 %v442, %v441
    %v452 = vpack.c.b16 %v444, %v443
    %461 = vmatpush.bf16.msra.mxu0 %v452
    %462 = vmatpush.bf16.msra.mxu0 %v451
    %463 = vmatpush.bf16.msra.mxu0 %v450
    %464 = vmatpush.bf16.msra.mxu0 %v449
    %465 = vmatpush.bf16.msra.mxu0 %v448
    %466 = vmatpush.bf16.msra.mxu0 %v447
    %467 = vmatpush.bf16.msra.mxu0 %v446
    %468 = vmatpush.bf16.msra.mxu0 %v445
    %469 = vmatmul.bf16.gmra.mxu0 %v375
    %v470 = vpop.f32.mrf.mxu0
    %v471 = vadd.f32 %v411, %v470
    %v472 = vpop.f32.mrf.mxu0
    %v473 = vadd.f32 %v411, %v472
    %474 = vmatmul.bf16.gmra.mxu0 %v376
    %v475 = vpop.f32.mrf.mxu0
    %v476 = vadd.f32 %v411, %v475
    %v477 = vpop.f32.mrf.mxu0
    %v478 = vadd.f32 %v411, %v477
    %479 = vmatmul.bf16.gmra.mxu0 %v377
    %v480 = vpop.f32.mrf.mxu0
    %v481 = vadd.f32 %v411, %v480
    %v482 = vpop.f32.mrf.mxu0
    %v483 = vadd.f32 %v411, %v482
    %484 = vmatmul.bf16.gmra.mxu0 %v378
    %v485 = vpop.f32.mrf.mxu0
    %v486 = vadd.f32 %v411, %v485
    %v487 = vpop.f32.mrf.mxu0
    %v488 = vadd.f32 %v411, %v487
    %489 = vmatmul.bf16.gmra.mxu0 %v379
    %v490 = vpop.f32.mrf.mxu0
    %v491 = vadd.f32 %v411, %v490
    %v492 = vpop.f32.mrf.mxu0
    %v493 = vadd.f32 %v411, %v492
    %494 = vmatmul.bf16.gmra.mxu0 %v380
    %v495 = vpop.f32.mrf.mxu0
    %v496 = vadd.f32 %v411, %v495
    %v497 = vpop.f32.mrf.mxu0
    %v498 = vadd.f32 %v411, %v497
    %499 = vmatmul.bf16.gmra.mxu0 %v381
    %v500 = vpop.f32.mrf.mxu0
    %v501 = vadd.f32 %v411, %v500
    %v502 = vpop.f32.mrf.mxu0
    %v503 = vadd.f32 %v411, %v502
    %504 = vmatmul.bf16.gmra.mxu0 %v382
    %v505 = vpop.f32.mrf.mxu0
    %v506 = vadd.f32 %v411, %v505
    %v507 = vpop.f32.mrf.mxu0
    %v508 = vadd.f32 %v411, %v507
    %509 = vdwg.mxu0
    %510 = vmatpush.bf16.msra.mxu0 %v452
    %511 = vmatpush.bf16.msra.mxu0 %v451
    %512 = vmatpush.bf16.msra.mxu0 %v450
    %513 = vmatpush.bf16.msra.mxu0 %v449
    %514 = vmatpush.bf16.msra.mxu0 %v448
    %515 = vmatpush.bf16.msra.mxu0 %v447
    %516 = vmatpush.bf16.msra.mxu0 %v446
    %517 = vmatpush.bf16.msra.mxu0 %v445
    %518 = vmatmul.bf16.gmra.mxu0 %v400
    %v519 = vpop.f32.mrf.mxu0
    %v520 = vadd.f32 %v411, %v519
    %v521 = vpop.f32.mrf.mxu0
    %v522 = vadd.f32 %v411, %v521
    %523 = vmatmul.bf16.gmra.mxu0 %v401
    %v524 = vpop.f32.mrf.mxu0
    %v525 = vadd.f32 %v411, %v524
    %v526 = vpop.f32.mrf.mxu0
    %v527 = vadd.f32 %v411, %v526
    %528 = vmatmul.bf16.gmra.mxu0 %v402
    %v529 = vpop.f32.mrf.mxu0
    %v530 = vadd.f32 %v411, %v529
    %v531 = vpop.f32.mrf.mxu0
    %v532 = vadd.f32 %v411, %v531
    %533 = vmatmul.bf16.gmra.mxu0 %v403
    %v534 = vpop.f32.mrf.mxu0
    %v535 = vadd.f32 %v411, %v534
    %v536 = vpop.f32.mrf.mxu0
    %v537 = vadd.f32 %v411, %v536
    %538 = vmatmul.bf16.gmra.mxu0 %v404
    %v539 = vpop.f32.mrf.mxu0
    %v540 = vadd.f32 %v411, %v539
    %v541 = vpop.f32.mrf.mxu0
    %v542 = vadd.f32 %v411, %v541
    %543 = vmatmul.bf16.gmra.mxu0 %v405
    %v544 = vpop.f32.mrf.mxu0
    %v545 = vadd.f32 %v411, %v544
    %v546 = vpop.f32.mrf.mxu0
    %v547 = vadd.f32 %v411, %v546
    %548 = vmatmul.bf16.gmra.mxu0 %v406
    %v549 = vpop.f32.mrf.mxu0
    %v550 = vadd.f32 %v411, %v549
    %v551 = vpop.f32.mrf.mxu0
    %v552 = vadd.f32 %v411, %v551
    %553 = vmatmul.bf16.gmra.mxu0 %v407
    %v554 = vpop.f32.mrf.mxu0
    %v555 = vadd.f32 %v411, %v554
    %v556 = vpop.f32.mrf.mxu0
    %v557 = vadd.f32 %v411, %v556
    %558 = vdwg.mxu0
    %v559 = vpack.c.bf16 %v473, %v471
    %v560 = vpack.c.bf16 %v478, %v476
    %v561 = vpack.c.bf16 %v483, %v481
    %v562 = vpack.c.bf16 %v488, %v486
    %v563 = vpack.c.bf16 %v493, %v491
    %v564 = vpack.c.bf16 %v498, %v496
    %v565 = vpack.c.bf16 %v503, %v501
    %v566 = vpack.c.bf16 %v508, %v506
    %s567 = scalar_lea.vmem [#allocation5], 128
    %v568 = vld [vmem:[%s567] sm:$0xf]
    %v569 = vld [vmem:[%s567 + $0x4] sm:$0xf]
    %v570 = vld [vmem:[%s567 + $0x8] sm:$0xf]
    %v571 = vld [vmem:[%s567 + $0xc] sm:$0xf]
    %v572 = vld [vmem:[%s567 + $0x10] sm:$0xf]
    %v573 = vld [vmem:[%s567 + $0x14] sm:$0xf]
    %v574 = vld [vmem:[%s567 + $0x18] sm:$0xf]
    %v575 = vld [vmem:[%s567 + $0x1c] sm:$0xf]
    %v576 = vld [vmem:[%s567 + $0x20] sm:$0xf]
    %v577 = vld [vmem:[%s567 + $0x24] sm:$0xf]
    %v578 = vld [vmem:[%s567 + $0x28] sm:$0xf]
    %v579 = vld [vmem:[%s567 + $0x2c] sm:$0xf]
    %v580 = vld [vmem:[%s567 + $0x30] sm:$0xf]
    %v581 = vld [vmem:[%s567 + $0x34] sm:$0xf]
    %v582 = vld [vmem:[%s567 + $0x38] sm:$0xf]
    %v583 = vld [vmem:[%s567 + $0x3c] sm:$0xf]
    %v600 = vunpack.c.l.b16 %v568
    %v601 = vunpack.c.l.b16 %v569
    %v602 = vunpack.c.l.b16 %v570
    %v603 = vunpack.c.l.b16 %v571
    %v604 = vunpack.c.l.b16 %v572
    %v605 = vunpack.c.l.b16 %v573
    %v606 = vunpack.c.l.b16 %v574
    %v607 = vunpack.c.l.b16 %v575
    %v608 = vunpack.c.l.b16 %v576
    %v609 = vunpack.c.l.b16 %v577
    %v610 = vunpack.c.l.b16 %v578
    %v611 = vunpack.c.l.b16 %v579
    %v612 = vunpack.c.l.b16 %v580
    %v613 = vunpack.c.l.b16 %v581
    %v614 = vunpack.c.l.b16 %v582
    %v615 = vunpack.c.l.b16 %v583
    %v616 = vpack.c.b16 %v601, %v600
    %v617 = vpack.c.b16 %v603, %v602
    %v618 = vpack.c.b16 %v605, %v604
    %v619 = vpack.c.b16 %v607, %v606
    %v620 = vpack.c.b16 %v609, %v608
    %v621 = vpack.c.b16 %v611, %v610
    %v622 = vpack.c.b16 %v613, %v612
    %v623 = vpack.c.b16 %v615, %v614
    %632 = vmatpush.bf16.msra.mxu0 %v623
    %633 = vmatpush.bf16.msra.mxu0 %v622
    %634 = vmatpush.bf16.msra.mxu0 %v621
    %635 = vmatpush.bf16.msra.mxu0 %v620
    %636 = vmatpush.bf16.msra.mxu0 %v619
    %637 = vmatpush.bf16.msra.mxu0 %v618
    %638 = vmatpush.bf16.msra.mxu0 %v617
    %639 = vmatpush.bf16.msra.mxu0 %v616
    %640 = vmatmul.bf16.gmra.mxu0 %v559
    %v641 = vpop.f32.mrf.mxu0
    %v642 = vadd.f32 0.0, %v641
    %v643 = vpop.f32.mrf.mxu0
    %v644 = vadd.f32 0.0, %v643
    %645 = vmatmul.bf16.gmra.mxu0 %v560
    %v646 = vpop.f32.mrf.mxu0
    %v647 = vadd.f32 0.0, %v646
    %v648 = vpop.f32.mrf.mxu0
    %v649 = vadd.f32 0.0, %v648
    %650 = vmatmul.bf16.gmra.mxu0 %v561
    %v651 = vpop.f32.mrf.mxu0
    %v652 = vadd.f32 0.0, %v651
    %v653 = vpop.f32.mrf.mxu0
    %v654 = vadd.f32 0.0, %v653
    %655 = vmatmul.bf16.gmra.mxu0 %v562
    %v656 = vpop.f32.mrf.mxu0
    %v657 = vadd.f32 0.0, %v656
    %v658 = vpop.f32.mrf.mxu0
    %v659 = vadd.f32 0.0, %v658
    %660 = vmatmul.bf16.gmra.mxu0 %v563
    %v661 = vpop.f32.mrf.mxu0
    %v662 = vadd.f32 0.0, %v661
    %v663 = vpop.f32.mrf.mxu0
    %v664 = vadd.f32 0.0, %v663
    %665 = vmatmul.bf16.gmra.mxu0 %v564
    %v666 = vpop.f32.mrf.mxu0
    %v667 = vadd.f32 0.0, %v666
    %v668 = vpop.f32.mrf.mxu0
    %v669 = vadd.f32 0.0, %v668
    %670 = vmatmul.bf16.gmra.mxu0 %v565
    %v671 = vpop.f32.mrf.mxu0
    %v672 = vadd.f32 0.0, %v671
    %v673 = vpop.f32.mrf.mxu0
    %v674 = vadd.f32 0.0, %v673
    %675 = vmatmul.bf16.gmra.mxu0 %v566
    %v676 = vpop.f32.mrf.mxu0
    %v677 = vadd.f32 0.0, %v676
    %v678 = vpop.f32.mrf.mxu0
    %v679 = vadd.f32 0.0, %v678
    %680 = vdwg.mxu0
    %v681 = vpack.c.bf16 %v522, %v520
    %v682 = vpack.c.bf16 %v527, %v525
    %v683 = vpack.c.bf16 %v532, %v530
    %v684 = vpack.c.bf16 %v537, %v535
    %v685 = vpack.c.bf16 %v542, %v540
    %v686 = vpack.c.bf16 %v547, %v545
    %v687 = vpack.c.bf16 %v552, %v550
    %v688 = vpack.c.bf16 %v557, %v555
    %689 = vmatpush.bf16.msra.mxu0 %v623
    %690 = vmatpush.bf16.msra.mxu0 %v622
    %691 = vmatpush.bf16.msra.mxu0 %v621
    %692 = vmatpush.bf16.msra.mxu0 %v620
    %693 = vmatpush.bf16.msra.mxu0 %v619
    %694 = vmatpush.bf16.msra.mxu0 %v618
    %695 = vmatpush.bf16.msra.mxu0 %v617
    %696 = vmatpush.bf16.msra.mxu0 %v616
    %697 = vmatmul.bf16.gmra.mxu0 %v681
    %v698 = vpop.f32.mrf.mxu0
    %v699 = vadd.f32 0.0, %v698
    %v700 = vpop.f32.mrf.mxu0
    %v701 = vadd.f32 0.0, %v700
    %702 = vmatmul.bf16.gmra.mxu0 %v682
    %v703 = vpop.f32.mrf.mxu0
    %v704 = vadd.f32 0.0, %v703
    %v705 = vpop.f32.mrf.mxu0
    %v706 = vadd.f32 0.0, %v705
    %707 = vmatmul.bf16.gmra.mxu0 %v683
    %v708 = vpop.f32.mrf.mxu0
    %v709 = vadd.f32 0.0, %v708
    %v710 = vpop.f32.mrf.mxu0
    %v711 = vadd.f32 0.0, %v710
    %712 = vmatmul.bf16.gmra.mxu0 %v684
    %v713 = vpop.f32.mrf.mxu0
    %v714 = vadd.f32 0.0, %v713
    %v715 = vpop.f32.mrf.mxu0
    %v716 = vadd.f32 0.0, %v715
    %717 = vmatmul.bf16.gmra.mxu0 %v685
    %v718 = vpop.f32.mrf.mxu0
    %v719 = vadd.f32 0.0, %v718
    %v720 = vpop.f32.mrf.mxu0
    %v721 = vadd.f32 0.0, %v720
    %722 = vmatmul.bf16.gmra.mxu0 %v686
    %v723 = vpop.f32.mrf.mxu0
    %v724 = vadd.f32 0.0, %v723
    %v725 = vpop.f32.mrf.mxu0
    %v726 = vadd.f32 0.0, %v725
    %727 = vmatmul.bf16.gmra.mxu0 %v687
    %v728 = vpop.f32.mrf.mxu0
    %v729 = vadd.f32 0.0, %v728
    %v730 = vpop.f32.mrf.mxu0
    %v731 = vadd.f32 0.0, %v730
    %732 = vmatmul.bf16.gmra.mxu0 %v688
    %v733 = vpop.f32.mrf.mxu0
    %v734 = vadd.f32 0.0, %v733
    %v735 = vpop.f32.mrf.mxu0
    %v736 = vadd.f32 0.0, %v735
    %737 = vdwg.mxu0
    %v738 = vpack.c.bf16 %v644, %v642
    %v739 = vpack.c.bf16 %v649, %v647
    %v740 = vpack.c.bf16 %v654, %v652
    %v741 = vpack.c.bf16 %v659, %v657
    %v742 = vpack.c.bf16 %v664, %v662
    %v743 = vpack.c.bf16 %v669, %v667
    %v744 = vpack.c.bf16 %v674, %v672
    %v745 = vpack.c.bf16 %v679, %v677
    %s746 = scalar_lea.vmem [#allocation8], 128
    %v747 = vld [vmem:[%s746] sm:$0xf]
    %v748 = vld [vmem:[%s746 + $0x4] sm:$0xf]
    %v749 = vld [vmem:[%s746 + $0x8] sm:$0xf]
    %v750 = vld [vmem:[%s746 + $0xc] sm:$0xf]
    %v751 = vld [vmem:[%s746 + $0x10] sm:$0xf]
    %v752 = vld [vmem:[%s746 + $0x14] sm:$0xf]
    %v753 = vld [vmem:[%s746 + $0x18] sm:$0xf]
    %v754 = vld [vmem:[%s746 + $0x1c] sm:$0xf]
    %v755 = vld [vmem:[%s746 + $0x20] sm:$0xf]
    %v756 = vld [vmem:[%s746 + $0x24] sm:$0xf]
    %v757 = vld [vmem:[%s746 + $0x28] sm:$0xf]
    %v758 = vld [vmem:[%s746 + $0x2c] sm:$0xf]
    %v759 = vld [vmem:[%s746 + $0x30] sm:$0xf]
    %v760 = vld [vmem:[%s746 + $0x34] sm:$0xf]
    %v761 = vld [vmem:[%s746 + $0x38] sm:$0xf]
    %v762 = vld [vmem:[%s746 + $0x3c] sm:$0xf]
    %v779 = vunpack.c.l.b16 %v747
    %v780 = vunpack.c.l.b16 %v748
    %v781 = vunpack.c.l.b16 %v749
    %v782 = vunpack.c.l.b16 %v750
    %v783 = vunpack.c.l.b16 %v751
    %v784 = vunpack.c.l.b16 %v752
    %v785 = vunpack.c.l.b16 %v753
    %v786 = vunpack.c.l.b16 %v754
    %v787 = vunpack.c.l.b16 %v755
    %v788 = vunpack.c.l.b16 %v756
    %v789 = vunpack.c.l.b16 %v757
    %v790 = vunpack.c.l.b16 %v758
    %v791 = vunpack.c.l.b16 %v759
    %v792 = vunpack.c.l.b16 %v760
    %v793 = vunpack.c.l.b16 %v761
    %v794 = vunpack.c.l.b16 %v762
    %v795 = vpack.c.b16 %v780, %v779
    %v796 = vpack.c.b16 %v782, %v781
    %v797 = vpack.c.b16 %v784, %v783
    %v798 = vpack.c.b16 %v786, %v785
    %v799 = vpack.c.b16 %v788, %v787
    %v800 = vpack.c.b16 %v790, %v789
    %v801 = vpack.c.b16 %v792, %v791
    %v802 = vpack.c.b16 %v794, %v793
    %811 = vmatpush.bf16.msra.mxu0 %v802
    %812 = vmatpush.bf16.msra.mxu0 %v801
    %813 = vmatpush.bf16.msra.mxu0 %v800
    %814 = vmatpush.bf16.msra.mxu0 %v799
    %815 = vmatpush.bf16.msra.mxu0 %v798
    %816 = vmatpush.bf16.msra.mxu0 %v797
    %817 = vmatpush.bf16.msra.mxu0 %v796
    %818 = vmatpush.bf16.msra.mxu0 %v795
    %819 = vmatmul.bf16.gmra.mxu0 %v738
    %v820 = vpop.f32.mrf.mxu0
    %v821 = vadd.f32 0.0, %v820
    %v822 = vpop.f32.mrf.mxu0
    %v823 = vadd.f32 0.0, %v822
    %824 = vmatmul.bf16.gmra.mxu0 %v739
    %v825 = vpop.f32.mrf.mxu0
    %v826 = vadd.f32 0.0, %v825
    %v827 = vpop.f32.mrf.mxu0
    %v828 = vadd.f32 0.0, %v827
    %829 = vmatmul.bf16.gmra.mxu0 %v740
    %v830 = vpop.f32.mrf.mxu0
    %v831 = vadd.f32 0.0, %v830
    %v832 = vpop.f32.mrf.mxu0
    %v833 = vadd.f32 0.0, %v832
    %834 = vmatmul.bf16.gmra.mxu0 %v741
    %v835 = vpop.f32.mrf.mxu0
    %v836 = vadd.f32 0.0, %v835
    %v837 = vpop.f32.mrf.mxu0
    %v838 = vadd.f32 0.0, %v837
    %839 = vmatmul.bf16.gmra.mxu0 %v742
    %v840 = vpop.f32.mrf.mxu0
    %v841 = vadd.f32 0.0, %v840
    %v842 = vpop.f32.mrf.mxu0
    %v843 = vadd.f32 0.0, %v842
    %844 = vmatmul.bf16.gmra.mxu0 %v743
    %v845 = vpop.f32.mrf.mxu0
    %v846 = vadd.f32 0.0, %v845
    %v847 = vpop.f32.mrf.mxu0
    %v848 = vadd.f32 0.0, %v847
    %849 = vmatmul.bf16.gmra.mxu0 %v744
    %v850 = vpop.f32.mrf.mxu0
    %v851 = vadd.f32 0.0, %v850
    %v852 = vpop.f32.mrf.mxu0
    %v853 = vadd.f32 0.0, %v852
    %854 = vmatmul.bf16.gmra.mxu0 %v745
    %v855 = vpop.f32.mrf.mxu0
    %v856 = vadd.f32 0.0, %v855
    %v857 = vpop.f32.mrf.mxu0
    %v858 = vadd.f32 0.0, %v857
    %859 = vdwg.mxu0
    %v860 = vpack.c.bf16 %v701, %v699
    %v861 = vpack.c.bf16 %v706, %v704
    %v862 = vpack.c.bf16 %v711, %v709
    %v863 = vpack.c.bf16 %v716, %v714
    %v864 = vpack.c.bf16 %v721, %v719
    %v865 = vpack.c.bf16 %v726, %v724
    %v866 = vpack.c.bf16 %v731, %v729
    %v867 = vpack.c.bf16 %v736, %v734
    %868 = vmatpush.bf16.msra.mxu0 %v802
    %869 = vmatpush.bf16.msra.mxu0 %v801
    %870 = vmatpush.bf16.msra.mxu0 %v800
    %871 = vmatpush.bf16.msra.mxu0 %v799
    %872 = vmatpush.bf16.msra.mxu0 %v798
    %873 = vmatpush.bf16.msra.mxu0 %v797
    %874 = vmatpush.bf16.msra.mxu0 %v796
    %875 = vmatpush.bf16.msra.mxu0 %v795
    %876 = vmatmul.bf16.gmra.mxu0 %v860
    %v877 = vpop.f32.mrf.mxu0
    %v878 = vadd.f32 0.0, %v877
    %v879 = vpop.f32.mrf.mxu0
    %v880 = vadd.f32 0.0, %v879
    %881 = vmatmul.bf16.gmra.mxu0 %v861
    %v882 = vpop.f32.mrf.mxu0
    %v883 = vadd.f32 0.0, %v882
    %v884 = vpop.f32.mrf.mxu0
    %v885 = vadd.f32 0.0, %v884
    %886 = vmatmul.bf16.gmra.mxu0 %v862
    %v887 = vpop.f32.mrf.mxu0
    %v888 = vadd.f32 0.0, %v887
    %v889 = vpop.f32.mrf.mxu0
    %v890 = vadd.f32 0.0, %v889
    %891 = vmatmul.bf16.gmra.mxu0 %v863
    %v892 = vpop.f32.mrf.mxu0
    %v893 = vadd.f32 0.0, %v892
    %v894 = vpop.f32.mrf.mxu0
    %v895 = vadd.f32 0.0, %v894
    %896 = vmatmul.bf16.gmra.mxu0 %v864
    %v897 = vpop.f32.mrf.mxu0
    %v898 = vadd.f32 0.0, %v897
    %v899 = vpop.f32.mrf.mxu0
    %v900 = vadd.f32 0.0, %v899
    %901 = vmatmul.bf16.gmra.mxu0 %v865
    %v902 = vpop.f32.mrf.mxu0
    %v903 = vadd.f32 0.0, %v902
    %v904 = vpop.f32.mrf.mxu0
    %v905 = vadd.f32 0.0, %v904
    %906 = vmatmul.bf16.gmra.mxu0 %v866
    %v907 = vpop.f32.mrf.mxu0
    %v908 = vadd.f32 0.0, %v907
    %v909 = vpop.f32.mrf.mxu0
    %v910 = vadd.f32 0.0, %v909
    %911 = vmatmul.bf16.gmra.mxu0 %v867
    %v912 = vpop.f32.mrf.mxu0
    %v913 = vadd.f32 0.0, %v912
    %v914 = vpop.f32.mrf.mxu0
    %v915 = vadd.f32 0.0, %v914
    %916 = vdwg.mxu0
    %v917 = vsub.f32 %v821, %v411
    %v918 = vsub.f32 %v823, %v411
    %v919 = vsub.f32 %v826, %v411
    %v920 = vsub.f32 %v828, %v411
    %v921 = vsub.f32 %v831, %v411
    %v922 = vsub.f32 %v833, %v411
    %v923 = vsub.f32 %v836, %v411
    %v924 = vsub.f32 %v838, %v411
    %v925 = vsub.f32 %v841, %v411
    %v926 = vsub.f32 %v843, %v411
    %v927 = vsub.f32 %v846, %v411
    %v928 = vsub.f32 %v848, %v411
    %v929 = vsub.f32 %v851, %v411
    %v930 = vsub.f32 %v853, %v411
    %v931 = vsub.f32 %v856, %v411
    %v932 = vsub.f32 %v858, %v411
    %v933 = vsub.f32 %v878, %v411
    %v934 = vsub.f32 %v880, %v411
    %v935 = vsub.f32 %v883, %v411
    %v936 = vsub.f32 %v885, %v411
    %v937 = vsub.f32 %v888, %v411
    %v938 = vsub.f32 %v890, %v411
    %v939 = vsub.f32 %v893, %v411
    %v940 = vsub.f32 %v895, %v411
    %v941 = vsub.f32 %v898, %v411
    %v942 = vsub.f32 %v900, %v411
    %v943 = vsub.f32 %v903, %v411
    %v944 = vsub.f32 %v905, %v411
    %v945 = vsub.f32 %v908, %v411
    %v946 = vsub.f32 %v910, %v411
    %v947 = vsub.f32 %v913, %v411
    %v948 = vsub.f32 %v915, %v411
    %v949 = vpack.c.bf16 %v918, %v917
    %v950 = vpack.c.bf16 %v920, %v919
    %v951 = vpack.c.bf16 %v922, %v921
    %v952 = vpack.c.bf16 %v924, %v923
    %v953 = vpack.c.bf16 %v926, %v925
    %v954 = vpack.c.bf16 %v928, %v927
    %v955 = vpack.c.bf16 %v930, %v929
    %v956 = vpack.c.bf16 %v932, %v931
    %s957 = scalar_lea.vmem [#allocation8], 64
    %v958 = vld [vmem:[%s957] sm:$0xf]
    %v959 = vld [vmem:[%s957 + $0x4] sm:$0xf]
    %v960 = vld [vmem:[%s957 + $0x8] sm:$0xf]
    %v961 = vld [vmem:[%s957 + $0xc] sm:$0xf]
    %v962 = vld [vmem:[%s957 + $0x10] sm:$0xf]
    %v963 = vld [vmem:[%s957 + $0x14] sm:$0xf]
    %v964 = vld [vmem:[%s957 + $0x18] sm:$0xf]
    %v965 = vld [vmem:[%s957 + $0x1c] sm:$0xf]
    %v966 = vld [vmem:[%s957 + $0x20] sm:$0xf]
    %v967 = vld [vmem:[%s957 + $0x24] sm:$0xf]
    %v968 = vld [vmem:[%s957 + $0x28] sm:$0xf]
    %v969 = vld [vmem:[%s957 + $0x2c] sm:$0xf]
    %v970 = vld [vmem:[%s957 + $0x30] sm:$0xf]
    %v971 = vld [vmem:[%s957 + $0x34] sm:$0xf]
    %v972 = vld [vmem:[%s957 + $0x38] sm:$0xf]
    %v973 = vld [vmem:[%s957 + $0x3c] sm:$0xf]
    %v990 = vunpack.c.l.b16 %v958
    %v991 = vunpack.c.l.b16 %v959
    %v992 = vunpack.c.l.b16 %v960
    %v993 = vunpack.c.l.b16 %v961
    %v994 = vunpack.c.l.b16 %v962
    %v995 = vunpack.c.l.b16 %v963
    %v996 = vunpack.c.l.b16 %v964
    %v997 = vunpack.c.l.b16 %v965
    %v998 = vunpack.c.l.b16 %v966
    %v999 = vunpack.c.l.b16 %v967
    %v1000 = vunpack.c.l.b16 %v968
    %v1001 = vunpack.c.l.b16 %v969
    %v1002 = vunpack.c.l.b16 %v970
    %v1003 = vunpack.c.l.b16 %v971
    %v1004 = vunpack.c.l.b16 %v972
    %v1005 = vunpack.c.l.b16 %v973
    %v1006 = vpack.c.b16 %v991, %v990
    %v1007 = vpack.c.b16 %v993, %v992
    %v1008 = vpack.c.b16 %v995, %v994
    %v1009 = vpack.c.b16 %v997, %v996
    %v1010 = vpack.c.b16 %v999, %v998
    %v1011 = vpack.c.b16 %v1001, %v1000
    %v1012 = vpack.c.b16 %v1003, %v1002
    %v1013 = vpack.c.b16 %v1005, %v1004
    %1022 = vmatpush.bf16.msra.mxu0 %v1013
    %1023 = vmatpush.bf16.msra.mxu0 %v1012
    %1024 = vmatpush.bf16.msra.mxu0 %v1011
    %1025 = vmatpush.bf16.msra.mxu0 %v1010
    %1026 = vmatpush.bf16.msra.mxu0 %v1009
    %1027 = vmatpush.bf16.msra.mxu0 %v1008
    %1028 = vmatpush.bf16.msra.mxu0 %v1007
    %1029 = vmatpush.bf16.msra.mxu0 %v1006
    %1030 = vmatmul.bf16.gmra.mxu0 %v949
    %v1031 = vpop.f32.mrf.mxu0
    %v1032 = vadd.f32 0.0, %v1031
    %v1033 = vpop.f32.mrf.mxu0
    %v1034 = vadd.f32 0.0, %v1033
    %1035 = vmatmul.bf16.gmra.mxu0 %v950
    %v1036 = vpop.f32.mrf.mxu0
    %v1037 = vadd.f32 0.0, %v1036
    %v1038 = vpop.f32.mrf.mxu0
    %v1039 = vadd.f32 0.0, %v1038
    %1040 = vmatmul.bf16.gmra.mxu0 %v951
    %v1041 = vpop.f32.mrf.mxu0
    %v1042 = vadd.f32 0.0, %v1041
    %v1043 = vpop.f32.mrf.mxu0
    %v1044 = vadd.f32 0.0, %v1043
    %1045 = vmatmul.bf16.gmra.mxu0 %v952
    %v1046 = vpop.f32.mrf.mxu0
    %v1047 = vadd.f32 0.0, %v1046
    %v1048 = vpop.f32.mrf.mxu0
    %v1049 = vadd.f32 0.0, %v1048
    %1050 = vmatmul.bf16.gmra.mxu0 %v953
    %v1051 = vpop.f32.mrf.mxu0
    %v1052 = vadd.f32 0.0, %v1051
    %v1053 = vpop.f32.mrf.mxu0
    %v1054 = vadd.f32 0.0, %v1053
    %1055 = vmatmul.bf16.gmra.mxu0 %v954
    %v1056 = vpop.f32.mrf.mxu0
    %v1057 = vadd.f32 0.0, %v1056
    %v1058 = vpop.f32.mrf.mxu0
    %v1059 = vadd.f32 0.0, %v1058
    %1060 = vmatmul.bf16.gmra.mxu0 %v955
    %v1061 = vpop.f32.mrf.mxu0
    %v1062 = vadd.f32 0.0, %v1061
    %v1063 = vpop.f32.mrf.mxu0
    %v1064 = vadd.f32 0.0, %v1063
    %1065 = vmatmul.bf16.gmra.mxu0 %v956
    %v1066 = vpop.f32.mrf.mxu0
    %v1067 = vadd.f32 0.0, %v1066
    %v1068 = vpop.f32.mrf.mxu0
    %v1069 = vadd.f32 0.0, %v1068
    %1070 = vdwg.mxu0
    %v1071 = vpack.c.bf16 %v934, %v933
    %v1072 = vpack.c.bf16 %v936, %v935
    %v1073 = vpack.c.bf16 %v938, %v937
    %v1074 = vpack.c.bf16 %v940, %v939
    %v1075 = vpack.c.bf16 %v942, %v941
    %v1076 = vpack.c.bf16 %v944, %v943
    %v1077 = vpack.c.bf16 %v946, %v945
    %v1078 = vpack.c.bf16 %v948, %v947
    %1079 = vmatpush.bf16.msra.mxu0 %v1013
    %1080 = vmatpush.bf16.msra.mxu0 %v1012
    %1081 = vmatpush.bf16.msra.mxu0 %v1011
    %1082 = vmatpush.bf16.msra.mxu0 %v1010
    %1083 = vmatpush.bf16.msra.mxu0 %v1009
    %1084 = vmatpush.bf16.msra.mxu0 %v1008
    %1085 = vmatpush.bf16.msra.mxu0 %v1007
    %1086 = vmatpush.bf16.msra.mxu0 %v1006
    %1087 = vmatmul.bf16.gmra.mxu0 %v1071
    %v1088 = vpop.f32.mrf.mxu0
    %v1089 = vadd.f32 0.0, %v1088
    %v1090 = vpop.f32.mrf.mxu0
    %v1091 = vadd.f32 0.0, %v1090
    %1092 = vmatmul.bf16.gmra.mxu0 %v1072
    %v1093 = vpop.f32.mrf.mxu0
    %v1094 = vadd.f32 0.0, %v1093
    %v1095 = vpop.f32.mrf.mxu0
    %v1096 = vadd.f32 0.0, %v1095
    %1097 = vmatmul.bf16.gmra.mxu0 %v1073
    %v1098 = vpop.f32.mrf.mxu0
    %v1099 = vadd.f32 0.0, %v1098
    %v1100 = vpop.f32.mrf.mxu0
    %v1101 = vadd.f32 0.0, %v1100
    %1102 = vmatmul.bf16.gmra.mxu0 %v1074
    %v1103 = vpop.f32.mrf.mxu0
    %v1104 = vadd.f32 0.0, %v1103
    %v1105 = vpop.f32.mrf.mxu0
    %v1106 = vadd.f32 0.0, %v1105
    %1107 = vmatmul.bf16.gmra.mxu0 %v1075
    %v1108 = vpop.f32.mrf.mxu0
    %v1109 = vadd.f32 0.0, %v1108
    %v1110 = vpop.f32.mrf.mxu0
    %v1111 = vadd.f32 0.0, %v1110
    %1112 = vmatmul.bf16.gmra.mxu0 %v1076
    %v1113 = vpop.f32.mrf.mxu0
    %v1114 = vadd.f32 0.0, %v1113
    %v1115 = vpop.f32.mrf.mxu0
    %v1116 = vadd.f32 0.0, %v1115
    %1117 = vmatmul.bf16.gmra.mxu0 %v1077
    %v1118 = vpop.f32.mrf.mxu0
    %v1119 = vadd.f32 0.0, %v1118
    %v1120 = vpop.f32.mrf.mxu0
    %v1121 = vadd.f32 0.0, %v1120
    %1122 = vmatmul.bf16.gmra.mxu0 %v1078
    %v1123 = vpop.f32.mrf.mxu0
    %v1124 = vadd.f32 0.0, %v1123
    %v1125 = vpop.f32.mrf.mxu0
    %v1126 = vadd.f32 0.0, %v1125
    %1127 = vdwg.mxu0
    %v1128 = vsub.f32 %v1032, %v131
    %v1129 = vsub.f32 %v1034, %v131
    %v1130 = vsub.f32 %v1037, %v131
    %v1131 = vsub.f32 %v1039, %v131
    %v1132 = vsub.f32 %v1042, %v131
    %v1133 = vsub.f32 %v1044, %v131
    %v1134 = vsub.f32 %v1047, %v131
    %v1135 = vsub.f32 %v1049, %v131
    %v1136 = vsub.f32 %v1052, %v131
    %v1137 = vsub.f32 %v1054, %v131
    %v1138 = vsub.f32 %v1057, %v131
    %v1139 = vsub.f32 %v1059, %v131
    %v1140 = vsub.f32 %v1062, %v131
    %v1141 = vsub.f32 %v1064, %v131
    %v1142 = vsub.f32 %v1067, %v131
    %v1143 = vsub.f32 %v1069, %v131
    %v1144 = vsub.f32 %v1089, %v131
    %v1145 = vsub.f32 %v1091, %v131
    %v1146 = vsub.f32 %v1094, %v131
    %v1147 = vsub.f32 %v1096, %v131
    %v1148 = vsub.f32 %v1099, %v131
    %v1149 = vsub.f32 %v1101, %v131
    %v1150 = vsub.f32 %v1104, %v131
    %v1151 = vsub.f32 %v1106, %v131
    %v1152 = vsub.f32 %v1109, %v131
    %v1153 = vsub.f32 %v1111, %v131
    %v1154 = vsub.f32 %v1114, %v131
    %v1155 = vsub.f32 %v1116, %v131
    %v1156 = vsub.f32 %v1119, %v131
    %v1157 = vsub.f32 %v1121, %v131
    %v1158 = vsub.f32 %v1124, %v131
    %v1159 = vsub.f32 %v1126, %v131
    %v1160 = vpack.c.bf16 %v1129, %v1128
    %v1161 = vpack.c.bf16 %v1131, %v1130
    %v1162 = vpack.c.bf16 %v1133, %v1132
    %v1163 = vpack.c.bf16 %v1135, %v1134
    %v1164 = vpack.c.bf16 %v1137, %v1136
    %v1165 = vpack.c.bf16 %v1139, %v1138
    %v1166 = vpack.c.bf16 %v1141, %v1140
    %v1167 = vpack.c.bf16 %v1143, %v1142
    %v1168 = vld [vmem:[#allocation8] sm:$0xf]
    %v1169 = vld [vmem:[#allocation8 + $0x4] sm:$0xf]
    %v1170 = vld [vmem:[#allocation8 + $0x8] sm:$0xf]
    %v1171 = vld [vmem:[#allocation8 + $0xc] sm:$0xf]
    %v1172 = vld [vmem:[#allocation8 + $0x10] sm:$0xf]
    %v1173 = vld [vmem:[#allocation8 + $0x14] sm:$0xf]
    %v1174 = vld [vmem:[#allocation8 + $0x18] sm:$0xf]
    %v1175 = vld [vmem:[#allocation8 + $0x1c] sm:$0xf]
    %v1176 = vld [vmem:[#allocation8 + $0x20] sm:$0xf]
    %v1177 = vld [vmem:[#allocation8 + $0x24] sm:$0xf]
    %v1178 = vld [vmem:[#allocation8 + $0x28] sm:$0xf]
    %v1179 = vld [vmem:[#allocation8 + $0x2c] sm:$0xf]
    %v1180 = vld [vmem:[#allocation8 + $0x30] sm:$0xf]
    %v1181 = vld [vmem:[#allocation8 + $0x34] sm:$0xf]
    %v1182 = vld [vmem:[#allocation8 + $0x38] sm:$0xf]
    %v1183 = vld [vmem:[#allocation8 + $0x3c] sm:$0xf]
    %v1200 = vunpack.c.l.b16 %v1168
    %v1201 = vunpack.c.l.b16 %v1169
    %v1202 = vunpack.c.l.b16 %v1170
    %v1203 = vunpack.c.l.b16 %v1171
    %v1204 = vunpack.c.l.b16 %v1172
    %v1205 = vunpack.c.l.b16 %v1173
    %v1206 = vunpack.c.l.b16 %v1174
    %v1207 = vunpack.c.l.b16 %v1175
    %v1208 = vunpack.c.l.b16 %v1176
    %v1209 = vunpack.c.l.b16 %v1177
    %v1210 = vunpack.c.l.b16 %v1178
    %v1211 = vunpack.c.l.b16 %v1179
    %v1212 = vunpack.c.l.b16 %v1180
    %v1213 = vunpack.c.l.b16 %v1181
    %v1214 = vunpack.c.l.b16 %v1182
    %v1215 = vunpack.c.l.b16 %v1183
    %v1216 = vpack.c.b16 %v1201, %v1200
    %v1217 = vpack.c.b16 %v1203, %v1202
    %v1218 = vpack.c.b16 %v1205, %v1204
    %v1219 = vpack.c.b16 %v1207, %v1206
    %v1220 = vpack.c.b16 %v1209, %v1208
    %v1221 = vpack.c.b16 %v1211, %v1210
    %v1222 = vpack.c.b16 %v1213, %v1212
    %v1223 = vpack.c.b16 %v1215, %v1214
    %1232 = vmatpush.bf16.msra.mxu0 %v1223
    %1233 = vmatpush.bf16.msra.mxu0 %v1222
    %1234 = vmatpush.bf16.msra.mxu0 %v1221
    %1235 = vmatpush.bf16.msra.mxu0 %v1220
    %1236 = vmatpush.bf16.msra.mxu0 %v1219
    %1237 = vmatpush.bf16.msra.mxu0 %v1218
    %1238 = vmatpush.bf16.msra.mxu0 %v1217
    %1239 = vmatpush.bf16.msra.mxu0 %v1216
    %1240 = vmatmul.bf16.gmra.mxu0 %v1160
    %v1241 = vpop.f32.mrf.mxu0
    %v1242 = vadd.f32 0.0, %v1241
    %v1243 = vpop.f32.mrf.mxu0
    %v1244 = vadd.f32 0.0, %v1243
    %1245 = vmatmul.bf16.gmra.mxu0 %v1161
    %v1246 = vpop.f32.mrf.mxu0
    %v1247 = vadd.f32 0.0, %v1246
    %v1248 = vpop.f32.mrf.mxu0
    %v1249 = vadd.f32 0.0, %v1248
    %1250 = vmatmul.bf16.gmra.mxu0 %v1162
    %v1251 = vpop.f32.mrf.mxu0
    %v1252 = vadd.f32 0.0, %v1251
    %v1253 = vpop.f32.mrf.mxu0
    %v1254 = vadd.f32 0.0, %v1253
    %1255 = vmatmul.bf16.gmra.mxu0 %v1163
    %v1256 = vpop.f32.mrf.mxu0
    %v1257 = vadd.f32 0.0, %v1256
    %v1258 = vpop.f32.mrf.mxu0
    %v1259 = vadd.f32 0.0, %v1258
    %1260 = vmatmul.bf16.gmra.mxu0 %v1164
    %v1261 = vpop.f32.mrf.mxu0
    %v1262 = vadd.f32 0.0, %v1261
    %v1263 = vpop.f32.mrf.mxu0
    %v1264 = vadd.f32 0.0, %v1263
    %1265 = vmatmul.bf16.gmra.mxu0 %v1165
    %v1266 = vpop.f32.mrf.mxu0
    %v1267 = vadd.f32 0.0, %v1266
    %v1268 = vpop.f32.mrf.mxu0
    %v1269 = vadd.f32 0.0, %v1268
    %1270 = vmatmul.bf16.gmra.mxu0 %v1166
    %v1271 = vpop.f32.mrf.mxu0
    %v1272 = vadd.f32 0.0, %v1271
    %v1273 = vpop.f32.mrf.mxu0
    %v1274 = vadd.f32 0.0, %v1273
    %1275 = vmatmul.bf16.gmra.mxu0 %v1167
    %v1276 = vpop.f32.mrf.mxu0
    %v1277 = vadd.f32 0.0, %v1276
    %v1278 = vpop.f32.mrf.mxu0
    %v1279 = vadd.f32 0.0, %v1278
    %1280 = vdwg.mxu0
    %v1281 = vpack.c.bf16 %v1145, %v1144
    %v1282 = vpack.c.bf16 %v1147, %v1146
    %v1283 = vpack.c.bf16 %v1149, %v1148
    %v1284 = vpack.c.bf16 %v1151, %v1150
    %v1285 = vpack.c.bf16 %v1153, %v1152
    %v1286 = vpack.c.bf16 %v1155, %v1154
    %v1287 = vpack.c.bf16 %v1157, %v1156
    %v1288 = vpack.c.bf16 %v1159, %v1158
    %1289 = vmatpush.bf16.msra.mxu0 %v1223
    %1290 = vmatpush.bf16.msra.mxu0 %v1222
    %1291 = vmatpush.bf16.msra.mxu0 %v1221
    %1292 = vmatpush.bf16.msra.mxu0 %v1220
    %1293 = vmatpush.bf16.msra.mxu0 %v1219
    %1294 = vmatpush.bf16.msra.mxu0 %v1218
    %1295 = vmatpush.bf16.msra.mxu0 %v1217
    %1296 = vmatpush.bf16.msra.mxu0 %v1216
    %1297 = vmatmul.bf16.gmra.mxu0 %v1281
    %v1298 = vpop.f32.mrf.mxu0
    %v1299 = vadd.f32 0.0, %v1298
    %v1300 = vpop.f32.mrf.mxu0
    %v1301 = vadd.f32 0.0, %v1300
    %1302 = vmatmul.bf16.gmra.mxu0 %v1282
    %v1303 = vpop.f32.mrf.mxu0
    %v1304 = vadd.f32 0.0, %v1303
    %v1305 = vpop.f32.mrf.mxu0
    %v1306 = vadd.f32 0.0, %v1305
    %1307 = vmatmul.bf16.gmra.mxu0 %v1283
    %v1308 = vpop.f32.mrf.mxu0
    %v1309 = vadd.f32 0.0, %v1308
    %v1310 = vpop.f32.mrf.mxu0
    %v1311 = vadd.f32 0.0, %v1310
    %1312 = vmatmul.bf16.gmra.mxu0 %v1284
    %v1313 = vpop.f32.mrf.mxu0
    %v1314 = vadd.f32 0.0, %v1313
    %v1315 = vpop.f32.mrf.mxu0
    %v1316 = vadd.f32 0.0, %v1315
    %1317 = vmatmul.bf16.gmra.mxu0 %v1285
    %v1318 = vpop.f32.mrf.mxu0
    %v1319 = vadd.f32 0.0, %v1318
    %v1320 = vpop.f32.mrf.mxu0
    %v1321 = vadd.f32 0.0, %v1320
    %1322 = vmatmul.bf16.gmra.mxu0 %v1286
    %v1323 = vpop.f32.mrf.mxu0
    %v1324 = vadd.f32 0.0, %v1323
    %v1325 = vpop.f32.mrf.mxu0
    %v1326 = vadd.f32 0.0, %v1325
    %1327 = vmatmul.bf16.gmra.mxu0 %v1287
    %v1328 = vpop.f32.mrf.mxu0
    %v1329 = vadd.f32 0.0, %v1328
    %v1330 = vpop.f32.mrf.mxu0
    %v1331 = vadd.f32 0.0, %v1330
    %1332 = vmatmul.bf16.gmra.mxu0 %v1288
    %v1333 = vpop.f32.mrf.mxu0
    %v1334 = vadd.f32 0.0, %v1333
    %v1335 = vpop.f32.mrf.mxu0
    %v1336 = vadd.f32 0.0, %v1335
    %1337 = vdwg.mxu0
    %1338 = vst [vmem:[#allocation10] sm:$0xff] %v1242
    %1339 = vst [vmem:[#allocation10 + $0x8] sm:$0xff] %v1244
    %1340 = vst [vmem:[#allocation10 + $0x10] sm:$0xff] %v1247
    %1341 = vst [vmem:[#allocation10 + $0x18] sm:$0xff] %v1249
    %1342 = vst [vmem:[#allocation10 + $0x20] sm:$0xff] %v1252
    %1343 = vst [vmem:[#allocation10 + $0x28] sm:$0xff] %v1254
    %1344 = vst [vmem:[#allocation10 + $0x30] sm:$0xff] %v1257
    %1345 = vst [vmem:[#allocation10 + $0x38] sm:$0xff] %v1259
    %1346 = vst [vmem:[#allocation10 + $0x40] sm:$0xff] %v1262
    %1347 = vst [vmem:[#allocation10 + $0x48] sm:$0xff] %v1264
    %1348 = vst [vmem:[#allocation10 + $0x50] sm:$0xff] %v1267
    %1349 = vst [vmem:[#allocation10 + $0x58] sm:$0xff] %v1269
    %1350 = vst [vmem:[#allocation10 + $0x60] sm:$0xff] %v1272
    %1351 = vst [vmem:[#allocation10 + $0x68] sm:$0xff] %v1274
    %1352 = vst [vmem:[#allocation10 + $0x70] sm:$0xff] %v1277
    %1353 = vst [vmem:[#allocation10 + $0x78] sm:$0xff] %v1279
    %1354 = vst [vmem:[#allocation10 + $0x80] sm:$0xff] %v1299
    %1355 = vst [vmem:[#allocation10 + $0x88] sm:$0xff] %v1301
    %1356 = vst [vmem:[#allocation10 + $0x90] sm:$0xff] %v1304
    %1357 = vst [vmem:[#allocation10 + $0x98] sm:$0xff] %v1306
    %1358 = vst [vmem:[#allocation10 + $0xa0] sm:$0xff] %v1309
    %1359 = vst [vmem:[#allocation10 + $0xa8] sm:$0xff] %v1311
    %1360 = vst [vmem:[#allocation10 + $0xb0] sm:$0xff] %v1314
    %1361 = vst [vmem:[#allocation10 + $0xb8] sm:$0xff] %v1316
    %1362 = vst [vmem:[#allocation10 + $0xc0] sm:$0xff] %v1319
    %1363 = vst [vmem:[#allocation10 + $0xc8] sm:$0xff] %v1321
    %1364 = vst [vmem:[#allocation10 + $0xd0] sm:$0xff] %v1324
    %1365 = vst [vmem:[#allocation10 + $0xd8] sm:$0xff] %v1326
    %1366 = vst [vmem:[#allocation10 + $0xe0] sm:$0xff] %v1329
    %1367 = vst [vmem:[#allocation10 + $0xe8] sm:$0xff] %v1331
    %1368 = vst [vmem:[#allocation10 + $0xf0] sm:$0xff] %v1334
    %1369 = vst [vmem:[#allocation10 + $0xf8] sm:$0xff] %v1336
    // Predicated region
    $region34: #{tpu_custom_call.1} parent=1 // pred_check
      _
    $region35: #{tpu_custom_call.1} parent=1 // pred_check_branch
      %1371 = sbr.rel (0) target = $region37
    $region36: #{tpu_custom_call.1} parent=1 // pred_region
      %1373 = vsyncadd [#allocation4], 0
      %s1374 = sshll.u32 [#allocation10], 4
      %s1375 = int_to_ptr.vmem [resolvable:$true] %s1374
      %s1376 = sshll.u32 %s4, 4
      %s1377 = int_to_ptr.hbm [resolvable:$true] %s1376
      %1382 = dma.vmem_to_hbm [thread:$0]  %s1375, 4096, %s1377, [#allocation4], 128, 128, 8
    $region37: #{tpu_custom_call.1} parent=1 // pred_fallthru
      _
    // Predicated region
    $region38: #{tpu_custom_call.1} parent=1 // pred_check
      _
    $region39: #{tpu_custom_call.1} parent=1 // pred_check_branch
      %1384 = sbr.rel (0) target = $region41
    $region40: #{tpu_custom_call.1} parent=1 // pred_region
      %1386 = dma.done [#allocation4], 4096
    $region41: #{tpu_custom_call.1} parent=1 // pred_fallthru
      _
    %1387 = vsyncpa [#allocation3], 1
    %1388 = vsyncpa [#allocation6], 1
    %1389 = vsyncpa [#allocation9], 1
    %1390 = vsyncpa [#allocation4], 1

</llo_original>
